<compile_context>
chip_gen: v5e
topology: v5e:2x2
jax: 0.10.0
libtpu: 0.0.40
codegen_flags: <defaults>
</compile_context>

<pallas_src>
import jax
import jax.numpy as jnp
from jax import lax
from jax.experimental import pallas as pl
from jax.experimental.pallas import tpu as pltpu

# ----- model hyper-params (small shapes consistent with the module's forward) -----
VOCAB_SIZE = 100
VOCAB_PAD = 128          # pad vocab to lane width for the one-hot embedding matmul
EMBED_DIM = 32
HIDDEN_DIM = 32          # EMBED_DIM == HIDDEN_DIM so per-layer weights stack cleanly
NUM_LAYERS = 3
NUM_CLASSES = 10
BATCH = 2
SEQ = 8


# ---------------------------------------------------------------------------
# Fused Pallas kernel: (embedding + layer-0 input proj) -> 3x LSTM -> FC
# ---------------------------------------------------------------------------
def fused_lstm_classifier_kernel(tok_ref, e0_ref, wih_ref, whh_ref, b_ref,
                                 fcw_ref, fcb_ref, out_ref):
    """
    tok_ref: (T*B, 1) int32     time-major flattened token ids (row = t*B + b)
    e0_ref:  (VOCAB_PAD, 4H)    bf16  embedding table pre-multiplied by W_ih0^T (+b0)
    wih_ref: (L-1, H, 4H)       bf16  W_ih^T for layers 1..L-1
    whh_ref: (L, H, 4H)         bf16  W_hh^T for all layers
    b_ref:   (L-1, 1, 4H)       f32   combined bias (b_ih + b_hh) for layers 1..L-1
    fcw_ref: (H, O)             bf16  fc weight^T
    fcb_ref: (1, O)             f32   fc bias
    out_ref: (B, O)             f32   logits
    """
    TB = tok_ref.shape[0]
    B = out_ref.shape[0]
    T = TB // B
    L = whh_ref.shape[0]
    H = whh_ref.shape[1]

    # --- embedding lookup + layer-0 input projection as ONE one-hot MXU matmul ---
    ids = tok_ref[...]                                              # (TB, 1) int32
    vpad = e0_ref.shape[0]
    lane_iota = lax.broadcasted_iota(jnp.int32, (TB, vpad), 1)
    onehot = (lane_iota == ids).astype(jnp.bfloat16)                # (TB, VOCAB_PAD)
    gx0 = jnp.dot(onehot, e0_ref[...],
                  preferred_element_type=jnp.float32)               # (TB, 4H) f32, b0 folded

    def cell(gates, c):
        # Two full-vreg transcendentals, then per-gate 32-lane extracts (f32 math).
        sig = jax.nn.sigmoid(gates)
        tnh = jnp.tanh(gates)
        i_g = sig[:, 0 * H:1 * H]
        f_g = sig[:, 1 * H:2 * H]
        g_g = tnh[:, 2 * H:3 * H]
        o_g = sig[:, 3 * H:4 * H]
        c_new = f_g * c + i_g * g_g
        h_new = o_g * jnp.tanh(c_new)
        return h_new, c_new

    # --- layer 0: recurrence over the pre-hoisted gates (all vreg-resident) ---
    whh0 = whh_ref[0]                                               # (H, 4H) bf16
    h = jnp.zeros((B, H), jnp.float32)
    c = jnp.zeros((B, H), jnp.float32)
    xs = []                                                         # per-t h of current layer
    for t in range(T):
        gates = gx0[t * B:(t + 1) * B] + jnp.dot(
            h.astype(jnp.bfloat16), whh0, preferred_element_type=jnp.float32)
        h, c = cell(gates, c)
        xs.append(h)

    # --- layers 1..L-1: per-cell projections -> wavefront-schedulable DAG ---
    # gx (x-dot + bias) depends only on the layer-below h at time t, so it sits OFF the
    # serial h-recurrence; only the h-dot -> EUP -> gate math chain is the critical path.
    for l in range(1, L):
        w_ih = wih_ref[l - 1]                                       # (H, 4H) bf16
        w_hh = whh_ref[l]                                           # (H, 4H) bf16
        bias = b_ref[l - 1]                                         # (1, 4H) f32
        h = jnp.zeros((B, H), jnp.float32)
        c = jnp.zeros((B, H), jnp.float32)
        ys = []
        for t in range(T):
            gx = jnp.dot(xs[t].astype(jnp.bfloat16), w_ih,
                         preferred_element_type=jnp.float32) + bias
            gates = gx + jnp.dot(h.astype(jnp.bfloat16), w_hh,
                                 preferred_element_type=jnp.float32)
            h, c = cell(gates, c)
            ys.append(h)
        xs = ys

    # --- FC head on the last timestep of the last layer ---
    out_ref[...] = (jnp.dot(h.astype(jnp.bfloat16), fcw_ref[...],
                            preferred_element_type=jnp.float32) + fcb_ref[...])


# ---------------------------------------------------------------------------
# pallas_call wrapper
# ---------------------------------------------------------------------------
def lstm_classifier_fused(tok_tm, params):
    TB = SEQ * BATCH
    H, H4, L, O = HIDDEN_DIM, 4 * HIDDEN_DIM, NUM_LAYERS, NUM_CLASSES
    return pl.pallas_call(
        fused_lstm_classifier_kernel,
        out_shape=jax.ShapeDtypeStruct((BATCH, O), jnp.float32),
        # Whole model (<100 KB weights, activations are a handful of vregs) is VMEM-
        # resident on every generation; single grid step is the fastest layout at B=2.
        grid=(1,),
        in_specs=[
            pl.BlockSpec((TB, 1), lambda i: (0, 0)),
            pl.BlockSpec((VOCAB_PAD, H4), lambda i: (0, 0)),
            pl.BlockSpec((L - 1, H, H4), lambda i: (0, 0, 0)),
            pl.BlockSpec((L, H, H4), lambda i: (0, 0, 0)),
            pl.BlockSpec((L - 1, 1, H4), lambda i: (0, 0, 0)),
            pl.BlockSpec((H, O), lambda i: (0, 0)),
            pl.BlockSpec((1, O), lambda i: (0, 0)),
        ],
        out_specs=pl.BlockSpec((BATCH, O), lambda i: (0, 0)),
        compiler_params=pltpu.CompilerParams(dimension_semantics=("arbitrary",)),
    )(tok_tm, params["e0"], params["w_ih_T"], params["w_hh_T"],
      params["b"], params["fc_w_T"], params["fc_b"])


@jax.jit
def lstm_classifier_forward(tokens, params):
    # Only glue left outside the kernel: flatten token ids time-major (row = t*B + b).
    B, T = tokens.shape
    tok_tm = tokens.T.reshape(T * B, 1).astype(jnp.int32)
    return lstm_classifier_fused(tok_tm, params)


# ---------------------------------------------------------------------------
# Deterministic parameter init (matches the module's explicit init)
# ---------------------------------------------------------------------------
def xavier_uniform(key, shape):
    fan_out, fan_in = shape
    bound = jnp.sqrt(6.0 / (fan_in + fan_out))
    return jax.random.uniform(key, shape, jnp.float32, -bound, bound)


def make_params(key):
    keys = jax.random.split(key, 2 + 2 * NUM_LAYERS + 1)
    H, H4 = HIDDEN_DIM, 4 * HIDDEN_DIM

    emb = xavier_uniform(keys[0], (VOCAB_SIZE, EMBED_DIM))
    emb_pad = jnp.zeros((VOCAB_PAD, EMBED_DIM), jnp.float32).at[:VOCAB_SIZE].set(emb)

    ortho = jax.nn.initializers.orthogonal()
    w_ih, w_hh = [], []
    for l in range(NUM_LAYERS):
        d_in = EMBED_DIM if l == 0 else HIDDEN_DIM           # both 32 -> stacks cleanly
        w_ih.append(xavier_uniform(keys[1 + 2 * l], (H4, d_in)))        # PyTorch layout
        w_hh.append(ortho(keys[2 + 2 * l], (H4, H), jnp.float32))
    b0 = jnp.zeros((1, H4), jnp.float32)                      # b_ih0 + b_hh0 (zero-init)

    params = {}
    # Layer-0 input projection (+bias) folded into the padded embedding table.
    params["e0"] = (emb_pad @ w_ih[0].T + b0).astype(jnp.bfloat16)        # (VOCAB_PAD, 4H)
    params["w_ih_T"] = jnp.stack([w.T for w in w_ih[1:]]).astype(jnp.bfloat16)  # (L-1, H, 4H)
    params["w_hh_T"] = jnp.stack([w.T for w in w_hh]).astype(jnp.bfloat16)      # (L, H, 4H)
    params["b"] = jnp.zeros((NUM_LAYERS - 1, 1, H4), jnp.float32)         # b_ih + b_hh, zero
    fc_w = xavier_uniform(keys[-1], (NUM_CLASSES, HIDDEN_DIM))
    params["fc_w_T"] = fc_w.T.astype(jnp.bfloat16)                        # (H, O)
    params["fc_b"] = jnp.zeros((1, NUM_CLASSES), jnp.float32)
    return params


if __name__ == "__main__":
    root = jax.random.PRNGKey(0)
    k_tok, k_par = jax.random.split(root)
    tokens = jax.random.randint(k_tok, (BATCH, SEQ), 0, VOCAB_SIZE, dtype=jnp.int32)
    params = make_params(k_par)

    logits = lstm_classifier_forward(tokens, params)
    jax.block_until_ready(logits)
    assert logits.shape == (BATCH, NUM_CLASSES)
    assert jnp.all(jnp.isfinite(logits))
    print("KERNEL_OK")
</pallas_src>

<mosaic_0001>
module attributes {stable_mosaic.version = 11 : i64} {
  func.func @fused_lstm_classifier_kernel(%arg0: i32, %arg1: memref<16x1xi32, #tpu.memory_space<vmem>>, %arg2: memref<128x128xbf16, #tpu.memory_space<vmem>>, %arg3: memref<2x32x128xbf16, #tpu.memory_space<vmem>>, %arg4: memref<3x32x128xbf16, #tpu.memory_space<vmem>>, %arg5: memref<2x1x128xf32, #tpu.memory_space<vmem>>, %arg6: memref<32x10xbf16, #tpu.memory_space<vmem>>, %arg7: memref<1x10xf32, #tpu.memory_space<vmem>>, %arg8: memref<2x10xf32, #tpu.memory_space<vmem>>) attributes {dimension_semantics = [#tpu.dimension_semantics<arbitrary>], iteration_bounds = array<i64: 1>, scalar_prefetch = 0 : i64, scratch_operands = 0 : i64, tpu.core_type = #tpu.core_type<tc>, window_params = [{pipeline_mode = #tpu.pipeline_mode<synchronous>, transform_indices = @transform_0, window_bounds = array<i64: 16, 1>}, {pipeline_mode = #tpu.pipeline_mode<synchronous>, transform_indices = @transform_1, window_bounds = array<i64: 128, 128>}, {pipeline_mode = #tpu.pipeline_mode<synchronous>, transform_indices = @transform_2, window_bounds = array<i64: 2, 32, 128>}, {pipeline_mode = #tpu.pipeline_mode<synchronous>, transform_indices = @transform_3, window_bounds = array<i64: 3, 32, 128>}, {pipeline_mode = #tpu.pipeline_mode<synchronous>, transform_indices = @transform_4, window_bounds = array<i64: 2, 1, 128>}, {pipeline_mode = #tpu.pipeline_mode<synchronous>, transform_indices = @transform_5, window_bounds = array<i64: 32, 10>}, {pipeline_mode = #tpu.pipeline_mode<synchronous>, transform_indices = @transform_6, window_bounds = array<i64: 1, 10>}, {pipeline_mode = #tpu.pipeline_mode<synchronous>, transform_indices = @transform_7, window_bounds = array<i64: 2, 10>}]} {
    %c0 = arith.constant 0 : index
    %c0_0 = arith.constant 0 : index
    %0 = vector.load %arg1[%c0, %c0_0] : memref<16x1xi32, #tpu.memory_space<vmem>>, vector<16x1xi32>
    %1 = tpu.iota {dimensions = array<i32: 1>} : vector<16x128xi32>
    %2 = vector.broadcast %0 : vector<16x1xi32> to vector<16x128xi32>
    %3 = arith.cmpi eq, %1, %2 : vector<16x128xi32>
    %4 = arith.extui %3 : vector<16x128xi1> to vector<16x128xi32>
    %5 = arith.sitofp %4 : vector<16x128xi32> to vector<16x128xf32>
    %6 = arith.truncf %5 : vector<16x128xf32> to vector<16x128xbf16>
    %c0_1 = arith.constant 0 : index
    %c0_2 = arith.constant 0 : index
    %7 = vector.load %arg2[%c0_1, %c0_2] : memref<128x128xbf16, #tpu.memory_space<vmem>>, vector<128x128xbf16>
    %cst = arith.constant dense<0.000000e+00> : vector<16x128xf32>
    %8 = tpu.matmul %6, %7, %cst {dimension_numbers = #tpu.dot_dimension_numbers<[1], [0], [0], [1], [0, 0, 1, 1], [], []>} : vector<16x128xbf16>, vector<128x128xbf16>, vector<16x128xf32> -> vector<16x128xf32>
    %c0_3 = arith.constant 0 : index
    %c0_4 = arith.constant 0 : index
    %c0_5 = arith.constant 0 : index
    %9 = vector.load %arg4[%c0_3, %c0_4, %c0_5] : memref<3x32x128xbf16, #tpu.memory_space<vmem>>, vector<1x32x128xbf16>
    %10 = vector.shape_cast %9 : vector<1x32x128xbf16> to vector<32x128xbf16>
    %cst_6 = arith.constant 0.000000e+00 : f32
    %11 = vector.broadcast %cst_6 : f32 to vector<2x32xf32>
    %cst_7 = arith.constant 0.000000e+00 : f32
    %12 = vector.broadcast %cst_7 : f32 to vector<2x32xf32>
    %13 = vector.extract_strided_slice %8 {offsets = [0, 0], sizes = [2, 128], strides = [1, 1]} : vector<16x128xf32> to vector<2x128xf32>
    %14 = arith.truncf %11 : vector<2x32xf32> to vector<2x32xbf16>
    %cst_8 = arith.constant dense<0.000000e+00> : vector<2x128xf32>
    %15 = tpu.matmul %14, %10, %cst_8 {dimension_numbers = #tpu.dot_dimension_numbers<[1], [0], [0], [1], [0, 0, 1, 1], [], []>} : vector<2x32xbf16>, vector<32x128xbf16>, vector<2x128xf32> -> vector<2x128xf32>
    %16 = arith.addf %13, %15 : vector<2x128xf32>
    %17 = arith.negf %16 : vector<2x128xf32>
    %18 = math.exp %17 : vector<2x128xf32>
    %cst_9 = arith.constant 1.000000e+00 : f32
    %19 = vector.broadcast %cst_9 : f32 to vector<2x128xf32>
    %20 = arith.addf %19, %18 : vector<2x128xf32>
    %21 = arith.divf %19, %20 : vector<2x128xf32>
    %22 = math.tanh %16 : vector<2x128xf32>
    %23 = vector.extract_strided_slice %21 {offsets = [0, 0], sizes = [2, 32], strides = [1, 1]} : vector<2x128xf32> to vector<2x32xf32>
    %24 = vector.extract_strided_slice %21 {offsets = [0, 32], sizes = [2, 32], strides = [1, 1]} : vector<2x128xf32> to vector<2x32xf32>
    %25 = vector.extract_strided_slice %22 {offsets = [0, 64], sizes = [2, 32], strides = [1, 1]} : vector<2x128xf32> to vector<2x32xf32>
    %26 = vector.extract_strided_slice %21 {offsets = [0, 96], sizes = [2, 32], strides = [1, 1]} : vector<2x128xf32> to vector<2x32xf32>
    %27 = arith.mulf %24, %12 : vector<2x32xf32>
    %28 = arith.mulf %23, %25 : vector<2x32xf32>
    %29 = arith.addf %27, %28 : vector<2x32xf32>
    %30 = math.tanh %29 : vector<2x32xf32>
    %31 = arith.mulf %26, %30 : vector<2x32xf32>
    %32 = vector.extract_strided_slice %8 {offsets = [2, 0], sizes = [2, 128], strides = [1, 1]} : vector<16x128xf32> to vector<2x128xf32>
    %33 = arith.truncf %31 : vector<2x32xf32> to vector<2x32xbf16>
    %cst_10 = arith.constant dense<0.000000e+00> : vector<2x128xf32>
    %34 = tpu.matmul %33, %10, %cst_10 {dimension_numbers = #tpu.dot_dimension_numbers<[1], [0], [0], [1], [0, 0, 1, 1], [], []>} : vector<2x32xbf16>, vector<32x128xbf16>, vector<2x128xf32> -> vector<2x128xf32>
    %35 = arith.addf %32, %34 : vector<2x128xf32>
    %36 = arith.negf %35 : vector<2x128xf32>
    %37 = math.exp %36 : vector<2x128xf32>
    %cst_11 = arith.constant 1.000000e+00 : f32
    %38 = vector.broadcast %cst_11 : f32 to vector<2x128xf32>
    %39 = arith.addf %38, %37 : vector<2x128xf32>
    %40 = arith.divf %38, %39 : vector<2x128xf32>
    %41 = math.tanh %35 : vector<2x128xf32>
    %42 = vector.extract_strided_slice %40 {offsets = [0, 0], sizes = [2, 32], strides = [1, 1]} : vector<2x128xf32> to vector<2x32xf32>
    %43 = vector.extract_strided_slice %40 {offsets = [0, 32], sizes = [2, 32], strides = [1, 1]} : vector<2x128xf32> to vector<2x32xf32>
    %44 = vector.extract_strided_slice %41 {offsets = [0, 64], sizes = [2, 32], strides = [1, 1]} : vector<2x128xf32> to vector<2x32xf32>
    %45 = vector.extract_strided_slice %40 {offsets = [0, 96], sizes = [2, 32], strides = [1, 1]} : vector<2x128xf32> to vector<2x32xf32>
    %46 = arith.mulf %43, %29 : vector<2x32xf32>
    %47 = arith.mulf %42, %44 : vector<2x32xf32>
    %48 = arith.addf %46, %47 : vector<2x32xf32>
    %49 = math.tanh %48 : vector<2x32xf32>
    %50 = arith.mulf %45, %49 : vector<2x32xf32>
    %51 = vector.extract_strided_slice %8 {offsets = [4, 0], sizes = [2, 128], strides = [1, 1]} : vector<16x128xf32> to vector<2x128xf32>
    %52 = arith.truncf %50 : vector<2x32xf32> to vector<2x32xbf16>
    %cst_12 = arith.constant dense<0.000000e+00> : vector<2x128xf32>
    %53 = tpu.matmul %52, %10, %cst_12 {dimension_numbers = #tpu.dot_dimension_numbers<[1], [0], [0], [1], [0, 0, 1, 1], [], []>} : vector<2x32xbf16>, vector<32x128xbf16>, vector<2x128xf32> -> vector<2x128xf32>
    %54 = arith.addf %51, %53 : vector<2x128xf32>
    %55 = arith.negf %54 : vector<2x128xf32>
    %56 = math.exp %55 : vector<2x128xf32>
    %cst_13 = arith.constant 1.000000e+00 : f32
    %57 = vector.broadcast %cst_13 : f32 to vector<2x128xf32>
    %58 = arith.addf %57, %56 : vector<2x128xf32>
    %59 = arith.divf %57, %58 : vector<2x128xf32>
    %60 = math.tanh %54 : vector<2x128xf32>
    %61 = vector.extract_strided_slice %59 {offsets = [0, 0], sizes = [2, 32], strides = [1, 1]} : vector<2x128xf32> to vector<2x32xf32>
    %62 = vector.extract_strided_slice %59 {offsets = [0, 32], sizes = [2, 32], strides = [1, 1]} : vector<2x128xf32> to vector<2x32xf32>
    %63 = vector.extract_strided_slice %60 {offsets = [0, 64], sizes = [2, 32], strides = [1, 1]} : vector<2x128xf32> to vector<2x32xf32>
    %64 = vector.extract_strided_slice %59 {offsets = [0, 96], sizes = [2, 32], strides = [1, 1]} : vector<2x128xf32> to vector<2x32xf32>
    %65 = arith.mulf %62, %48 : vector<2x32xf32>
    %66 = arith.mulf %61, %63 : vector<2x32xf32>
    %67 = arith.addf %65, %66 : vector<2x32xf32>
    %68 = math.tanh %67 : vector<2x32xf32>
    %69 = arith.mulf %64, %68 : vector<2x32xf32>
    %70 = vector.extract_strided_slice %8 {offsets = [6, 0], sizes = [2, 128], strides = [1, 1]} : vector<16x128xf32> to vector<2x128xf32>
    %71 = arith.truncf %69 : vector<2x32xf32> to vector<2x32xbf16>
    %cst_14 = arith.constant dense<0.000000e+00> : vector<2x128xf32>
    %72 = tpu.matmul %71, %10, %cst_14 {dimension_numbers = #tpu.dot_dimension_numbers<[1], [0], [0], [1], [0, 0, 1, 1], [], []>} : vector<2x32xbf16>, vector<32x128xbf16>, vector<2x128xf32> -> vector<2x128xf32>
    %73 = arith.addf %70, %72 : vector<2x128xf32>
    %74 = arith.negf %73 : vector<2x128xf32>
    %75 = math.exp %74 : vector<2x128xf32>
    %cst_15 = arith.constant 1.000000e+00 : f32
    %76 = vector.broadcast %cst_15 : f32 to vector<2x128xf32>
    %77 = arith.addf %76, %75 : vector<2x128xf32>
    %78 = arith.divf %76, %77 : vector<2x128xf32>
    %79 = math.tanh %73 : vector<2x128xf32>
    %80 = vector.extract_strided_slice %78 {offsets = [0, 0], sizes = [2, 32], strides = [1, 1]} : vector<2x128xf32> to vector<2x32xf32>
    %81 = vector.extract_strided_slice %78 {offsets = [0, 32], sizes = [2, 32], strides = [1, 1]} : vector<2x128xf32> to vector<2x32xf32>
    %82 = vector.extract_strided_slice %79 {offsets = [0, 64], sizes = [2, 32], strides = [1, 1]} : vector<2x128xf32> to vector<2x32xf32>
    %83 = vector.extract_strided_slice %78 {offsets = [0, 96], sizes = [2, 32], strides = [1, 1]} : vector<2x128xf32> to vector<2x32xf32>
    %84 = arith.mulf %81, %67 : vector<2x32xf32>
    %85 = arith.mulf %80, %82 : vector<2x32xf32>
    %86 = arith.addf %84, %85 : vector<2x32xf32>
    %87 = math.tanh %86 : vector<2x32xf32>
    %88 = arith.mulf %83, %87 : vector<2x32xf32>
    %89 = vector.extract_strided_slice %8 {offsets = [8, 0], sizes = [2, 128], strides = [1, 1]} : vector<16x128xf32> to vector<2x128xf32>
    %90 = arith.truncf %88 : vector<2x32xf32> to vector<2x32xbf16>
    %cst_16 = arith.constant dense<0.000000e+00> : vector<2x128xf32>
    %91 = tpu.matmul %90, %10, %cst_16 {dimension_numbers = #tpu.dot_dimension_numbers<[1], [0], [0], [1], [0, 0, 1, 1], [], []>} : vector<2x32xbf16>, vector<32x128xbf16>, vector<2x128xf32> -> vector<2x128xf32>
    %92 = arith.addf %89, %91 : vector<2x128xf32>
    %93 = arith.negf %92 : vector<2x128xf32>
    %94 = math.exp %93 : vector<2x128xf32>
    %cst_17 = arith.constant 1.000000e+00 : f32
    %95 = vector.broadcast %cst_17 : f32 to vector<2x128xf32>
    %96 = arith.addf %95, %94 : vector<2x128xf32>
    %97 = arith.divf %95, %96 : vector<2x128xf32>
    %98 = math.tanh %92 : vector<2x128xf32>
    %99 = vector.extract_strided_slice %97 {offsets = [0, 0], sizes = [2, 32], strides = [1, 1]} : vector<2x128xf32> to vector<2x32xf32>
    %100 = vector.extract_strided_slice %97 {offsets = [0, 32], sizes = [2, 32], strides = [1, 1]} : vector<2x128xf32> to vector<2x32xf32>
    %101 = vector.extract_strided_slice %98 {offsets = [0, 64], sizes = [2, 32], strides = [1, 1]} : vector<2x128xf32> to vector<2x32xf32>
    %102 = vector.extract_strided_slice %97 {offsets = [0, 96], sizes = [2, 32], strides = [1, 1]} : vector<2x128xf32> to vector<2x32xf32>
    %103 = arith.mulf %100, %86 : vector<2x32xf32>
    %104 = arith.mulf %99, %101 : vector<2x32xf32>
    %105 = arith.addf %103, %104 : vector<2x32xf32>
    %106 = math.tanh %105 : vector<2x32xf32>
    %107 = arith.mulf %102, %106 : vector<2x32xf32>
    %108 = vector.extract_strided_slice %8 {offsets = [10, 0], sizes = [2, 128], strides = [1, 1]} : vector<16x128xf32> to vector<2x128xf32>
    %109 = arith.truncf %107 : vector<2x32xf32> to vector<2x32xbf16>
    %cst_18 = arith.constant dense<0.000000e+00> : vector<2x128xf32>
    %110 = tpu.matmul %109, %10, %cst_18 {dimension_numbers = #tpu.dot_dimension_numbers<[1], [0], [0], [1], [0, 0, 1, 1], [], []>} : vector<2x32xbf16>, vector<32x128xbf16>, vector<2x128xf32> -> vector<2x128xf32>
    %111 = arith.addf %108, %110 : vector<2x128xf32>
    %112 = arith.negf %111 : vector<2x128xf32>
    %113 = math.exp %112 : vector<2x128xf32>
    %cst_19 = arith.constant 1.000000e+00 : f32
    %114 = vector.broadcast %cst_19 : f32 to vector<2x128xf32>
    %115 = arith.addf %114, %113 : vector<2x128xf32>
    %116 = arith.divf %114, %115 : vector<2x128xf32>
    %117 = math.tanh %111 : vector<2x128xf32>
    %118 = vector.extract_strided_slice %116 {offsets = [0, 0], sizes = [2, 32], strides = [1, 1]} : vector<2x128xf32> to vector<2x32xf32>
    %119 = vector.extract_strided_slice %116 {offsets = [0, 32], sizes = [2, 32], strides = [1, 1]} : vector<2x128xf32> to vector<2x32xf32>
    %120 = vector.extract_strided_slice %117 {offsets = [0, 64], sizes = [2, 32], strides = [1, 1]} : vector<2x128xf32> to vector<2x32xf32>
    %121 = vector.extract_strided_slice %116 {offsets = [0, 96], sizes = [2, 32], strides = [1, 1]} : vector<2x128xf32> to vector<2x32xf32>
    %122 = arith.mulf %119, %105 : vector<2x32xf32>
    %123 = arith.mulf %118, %120 : vector<2x32xf32>
    %124 = arith.addf %122, %123 : vector<2x32xf32>
    %125 = math.tanh %124 : vector<2x32xf32>
    %126 = arith.mulf %121, %125 : vector<2x32xf32>
    %127 = vector.extract_strided_slice %8 {offsets = [12, 0], sizes = [2, 128], strides = [1, 1]} : vector<16x128xf32> to vector<2x128xf32>
    %128 = arith.truncf %126 : vector<2x32xf32> to vector<2x32xbf16>
    %cst_20 = arith.constant dense<0.000000e+00> : vector<2x128xf32>
    %129 = tpu.matmul %128, %10, %cst_20 {dimension_numbers = #tpu.dot_dimension_numbers<[1], [0], [0], [1], [0, 0, 1, 1], [], []>} : vector<2x32xbf16>, vector<32x128xbf16>, vector<2x128xf32> -> vector<2x128xf32>
    %130 = arith.addf %127, %129 : vector<2x128xf32>
    %131 = arith.negf %130 : vector<2x128xf32>
    %132 = math.exp %131 : vector<2x128xf32>
    %cst_21 = arith.constant 1.000000e+00 : f32
    %133 = vector.broadcast %cst_21 : f32 to vector<2x128xf32>
    %134 = arith.addf %133, %132 : vector<2x128xf32>
    %135 = arith.divf %133, %134 : vector<2x128xf32>
    %136 = math.tanh %130 : vector<2x128xf32>
    %137 = vector.extract_strided_slice %135 {offsets = [0, 0], sizes = [2, 32], strides = [1, 1]} : vector<2x128xf32> to vector<2x32xf32>
    %138 = vector.extract_strided_slice %135 {offsets = [0, 32], sizes = [2, 32], strides = [1, 1]} : vector<2x128xf32> to vector<2x32xf32>
    %139 = vector.extract_strided_slice %136 {offsets = [0, 64], sizes = [2, 32], strides = [1, 1]} : vector<2x128xf32> to vector<2x32xf32>
    %140 = vector.extract_strided_slice %135 {offsets = [0, 96], sizes = [2, 32], strides = [1, 1]} : vector<2x128xf32> to vector<2x32xf32>
    %141 = arith.mulf %138, %124 : vector<2x32xf32>
    %142 = arith.mulf %137, %139 : vector<2x32xf32>
    %143 = arith.addf %141, %142 : vector<2x32xf32>
    %144 = math.tanh %143 : vector<2x32xf32>
    %145 = arith.mulf %140, %144 : vector<2x32xf32>
    %146 = vector.extract_strided_slice %8 {offsets = [14, 0], sizes = [2, 128], strides = [1, 1]} : vector<16x128xf32> to vector<2x128xf32>
    %147 = arith.truncf %145 : vector<2x32xf32> to vector<2x32xbf16>
    %cst_22 = arith.constant dense<0.000000e+00> : vector<2x128xf32>
    %148 = tpu.matmul %147, %10, %cst_22 {dimension_numbers = #tpu.dot_dimension_numbers<[1], [0], [0], [1], [0, 0, 1, 1], [], []>} : vector<2x32xbf16>, vector<32x128xbf16>, vector<2x128xf32> -> vector<2x128xf32>
    %149 = arith.addf %146, %148 : vector<2x128xf32>
    %150 = arith.negf %149 : vector<2x128xf32>
    %151 = math.exp %150 : vector<2x128xf32>
    %cst_23 = arith.constant 1.000000e+00 : f32
    %152 = vector.broadcast %cst_23 : f32 to vector<2x128xf32>
    %153 = arith.addf %152, %151 : vector<2x128xf32>
    %154 = arith.divf %152, %153 : vector<2x128xf32>
    %155 = math.tanh %149 : vector<2x128xf32>
    %156 = vector.extract_strided_slice %154 {offsets = [0, 0], sizes = [2, 32], strides = [1, 1]} : vector<2x128xf32> to vector<2x32xf32>
    %157 = vector.extract_strided_slice %154 {offsets = [0, 32], sizes = [2, 32], strides = [1, 1]} : vector<2x128xf32> to vector<2x32xf32>
    %158 = vector.extract_strided_slice %155 {offsets = [0, 64], sizes = [2, 32], strides = [1, 1]} : vector<2x128xf32> to vector<2x32xf32>
    %159 = vector.extract_strided_slice %154 {offsets = [0, 96], sizes = [2, 32], strides = [1, 1]} : vector<2x128xf32> to vector<2x32xf32>
    %160 = arith.mulf %157, %143 : vector<2x32xf32>
    %161 = arith.mulf %156, %158 : vector<2x32xf32>
    %162 = arith.addf %160, %161 : vector<2x32xf32>
    %163 = math.tanh %162 : vector<2x32xf32>
    %164 = arith.mulf %159, %163 : vector<2x32xf32>
    %c0_24 = arith.constant 0 : index
    %c0_25 = arith.constant 0 : index
    %c0_26 = arith.constant 0 : index
    %165 = vector.load %arg3[%c0_24, %c0_25, %c0_26] : memref<2x32x128xbf16, #tpu.memory_space<vmem>>, vector<1x32x128xbf16>
    %166 = vector.shape_cast %165 : vector<1x32x128xbf16> to vector<32x128xbf16>
    %c1 = arith.constant 1 : index
    %c0_27 = arith.constant 0 : index
    %c0_28 = arith.constant 0 : index
    %167 = vector.load %arg4[%c1, %c0_27, %c0_28] : memref<3x32x128xbf16, #tpu.memory_space<vmem>>, vector<1x32x128xbf16>
    %168 = vector.shape_cast %167 : vector<1x32x128xbf16> to vector<32x128xbf16>
    %c0_29 = arith.constant 0 : index
    %c0_30 = arith.constant 0 : index
    %c0_31 = arith.constant 0 : index
    %169 = vector.load %arg5[%c0_29, %c0_30, %c0_31] : memref<2x1x128xf32, #tpu.memory_space<vmem>>, vector<1x1x128xf32>
    %170 = vector.shape_cast %169 : vector<1x1x128xf32> to vector<1x128xf32>
    %cst_32 = arith.constant 0.000000e+00 : f32
    %171 = vector.broadcast %cst_32 : f32 to vector<2x32xf32>
    %cst_33 = arith.constant 0.000000e+00 : f32
    %172 = vector.broadcast %cst_33 : f32 to vector<2x32xf32>
    %173 = arith.truncf %31 : vector<2x32xf32> to vector<2x32xbf16>
    %cst_34 = arith.constant dense<0.000000e+00> : vector<2x128xf32>
    %174 = tpu.matmul %173, %166, %cst_34 {dimension_numbers = #tpu.dot_dimension_numbers<[1], [0], [0], [1], [0, 0, 1, 1], [], []>} : vector<2x32xbf16>, vector<32x128xbf16>, vector<2x128xf32> -> vector<2x128xf32>
    %175 = vector.broadcast %170 : vector<1x128xf32> to vector<2x128xf32>
    %176 = arith.addf %174, %175 : vector<2x128xf32>
    %177 = arith.truncf %171 : vector<2x32xf32> to vector<2x32xbf16>
    %cst_35 = arith.constant dense<0.000000e+00> : vector<2x128xf32>
    %178 = tpu.matmul %177, %168, %cst_35 {dimension_numbers = #tpu.dot_dimension_numbers<[1], [0], [0], [1], [0, 0, 1, 1], [], []>} : vector<2x32xbf16>, vector<32x128xbf16>, vector<2x128xf32> -> vector<2x128xf32>
    %179 = arith.addf %176, %178 : vector<2x128xf32>
    %180 = arith.negf %179 : vector<2x128xf32>
    %181 = math.exp %180 : vector<2x128xf32>
    %cst_36 = arith.constant 1.000000e+00 : f32
    %182 = vector.broadcast %cst_36 : f32 to vector<2x128xf32>
    %183 = arith.addf %182, %181 : vector<2x128xf32>
    %184 = arith.divf %182, %183 : vector<2x128xf32>
    %185 = math.tanh %179 : vector<2x128xf32>
    %186 = vector.extract_strided_slice %184 {offsets = [0, 0], sizes = [2, 32], strides = [1, 1]} : vector<2x128xf32> to vector<2x32xf32>
    %187 = vector.extract_strided_slice %184 {offsets = [0, 32], sizes = [2, 32], strides = [1, 1]} : vector<2x128xf32> to vector<2x32xf32>
    %188 = vector.extract_strided_slice %185 {offsets = [0, 64], sizes = [2, 32], strides = [1, 1]} : vector<2x128xf32> to vector<2x32xf32>
    %189 = vector.extract_strided_slice %184 {offsets = [0, 96], sizes = [2, 32], strides = [1, 1]} : vector<2x128xf32> to vector<2x32xf32>
    %190 = arith.mulf %187, %172 : vector<2x32xf32>
    %191 = arith.mulf %186, %188 : vector<2x32xf32>
    %192 = arith.addf %190, %191 : vector<2x32xf32>
    %193 = math.tanh %192 : vector<2x32xf32>
    %194 = arith.mulf %189, %193 : vector<2x32xf32>
    %195 = arith.truncf %50 : vector<2x32xf32> to vector<2x32xbf16>
    %cst_37 = arith.constant dense<0.000000e+00> : vector<2x128xf32>
    %196 = tpu.matmul %195, %166, %cst_37 {dimension_numbers = #tpu.dot_dimension_numbers<[1], [0], [0], [1], [0, 0, 1, 1], [], []>} : vector<2x32xbf16>, vector<32x128xbf16>, vector<2x128xf32> -> vector<2x128xf32>
    %197 = vector.broadcast %170 : vector<1x128xf32> to vector<2x128xf32>
    %198 = arith.addf %196, %197 : vector<2x128xf32>
    %199 = arith.truncf %194 : vector<2x32xf32> to vector<2x32xbf16>
    %cst_38 = arith.constant dense<0.000000e+00> : vector<2x128xf32>
    %200 = tpu.matmul %199, %168, %cst_38 {dimension_numbers = #tpu.dot_dimension_numbers<[1], [0], [0], [1], [0, 0, 1, 1], [], []>} : vector<2x32xbf16>, vector<32x128xbf16>, vector<2x128xf32> -> vector<2x128xf32>
    %201 = arith.addf %198, %200 : vector<2x128xf32>
    %202 = arith.negf %201 : vector<2x128xf32>
    %203 = math.exp %202 : vector<2x128xf32>
    %cst_39 = arith.constant 1.000000e+00 : f32
    %204 = vector.broadcast %cst_39 : f32 to vector<2x128xf32>
    %205 = arith.addf %204, %203 : vector<2x128xf32>
    %206 = arith.divf %204, %205 : vector<2x128xf32>
    %207 = math.tanh %201 : vector<2x128xf32>
    %208 = vector.extract_strided_slice %206 {offsets = [0, 0], sizes = [2, 32], strides = [1, 1]} : vector<2x128xf32> to vector<2x32xf32>
    %209 = vector.extract_strided_slice %206 {offsets = [0, 32], sizes = [2, 32], strides = [1, 1]} : vector<2x128xf32> to vector<2x32xf32>
    %210 = vector.extract_strided_slice %207 {offsets = [0, 64], sizes = [2, 32], strides = [1, 1]} : vector<2x128xf32> to vector<2x32xf32>
    %211 = vector.extract_strided_slice %206 {offsets = [0, 96], sizes = [2, 32], strides = [1, 1]} : vector<2x128xf32> to vector<2x32xf32>
    %212 = arith.mulf %209, %192 : vector<2x32xf32>
    %213 = arith.mulf %208, %210 : vector<2x32xf32>
    %214 = arith.addf %212, %213 : vector<2x32xf32>
    %215 = math.tanh %214 : vector<2x32xf32>
    %216 = arith.mulf %211, %215 : vector<2x32xf32>
    %217 = arith.truncf %69 : vector<2x32xf32> to vector<2x32xbf16>
    %cst_40 = arith.constant dense<0.000000e+00> : vector<2x128xf32>
    %218 = tpu.matmul %217, %166, %cst_40 {dimension_numbers = #tpu.dot_dimension_numbers<[1], [0], [0], [1], [0, 0, 1, 1], [], []>} : vector<2x32xbf16>, vector<32x128xbf16>, vector<2x128xf32> -> vector<2x128xf32>
    %219 = vector.broadcast %170 : vector<1x128xf32> to vector<2x128xf32>
    %220 = arith.addf %218, %219 : vector<2x128xf32>
    %221 = arith.truncf %216 : vector<2x32xf32> to vector<2x32xbf16>
    %cst_41 = arith.constant dense<0.000000e+00> : vector<2x128xf32>
    %222 = tpu.matmul %221, %168, %cst_41 {dimension_numbers = #tpu.dot_dimension_numbers<[1], [0], [0], [1], [0, 0, 1, 1], [], []>} : vector<2x32xbf16>, vector<32x128xbf16>, vector<2x128xf32> -> vector<2x128xf32>
    %223 = arith.addf %220, %222 : vector<2x128xf32>
    %224 = arith.negf %223 : vector<2x128xf32>
    %225 = math.exp %224 : vector<2x128xf32>
    %cst_42 = arith.constant 1.000000e+00 : f32
    %226 = vector.broadcast %cst_42 : f32 to vector<2x128xf32>
    %227 = arith.addf %226, %225 : vector<2x128xf32>
    %228 = arith.divf %226, %227 : vector<2x128xf32>
    %229 = math.tanh %223 : vector<2x128xf32>
    %230 = vector.extract_strided_slice %228 {offsets = [0, 0], sizes = [2, 32], strides = [1, 1]} : vector<2x128xf32> to vector<2x32xf32>
    %231 = vector.extract_strided_slice %228 {offsets = [0, 32], sizes = [2, 32], strides = [1, 1]} : vector<2x128xf32> to vector<2x32xf32>
    %232 = vector.extract_strided_slice %229 {offsets = [0, 64], sizes = [2, 32], strides = [1, 1]} : vector<2x128xf32> to vector<2x32xf32>
    %233 = vector.extract_strided_slice %228 {offsets = [0, 96], sizes = [2, 32], strides = [1, 1]} : vector<2x128xf32> to vector<2x32xf32>
    %234 = arith.mulf %231, %214 : vector<2x32xf32>
    %235 = arith.mulf %230, %232 : vector<2x32xf32>
    %236 = arith.addf %234, %235 : vector<2x32xf32>
    %237 = math.tanh %236 : vector<2x32xf32>
    %238 = arith.mulf %233, %237 : vector<2x32xf32>
    %239 = arith.truncf %88 : vector<2x32xf32> to vector<2x32xbf16>
    %cst_43 = arith.constant dense<0.000000e+00> : vector<2x128xf32>
    %240 = tpu.matmul %239, %166, %cst_43 {dimension_numbers = #tpu.dot_dimension_numbers<[1], [0], [0], [1], [0, 0, 1, 1], [], []>} : vector<2x32xbf16>, vector<32x128xbf16>, vector<2x128xf32> -> vector<2x128xf32>
    %241 = vector.broadcast %170 : vector<1x128xf32> to vector<2x128xf32>
    %242 = arith.addf %240, %241 : vector<2x128xf32>
    %243 = arith.truncf %238 : vector<2x32xf32> to vector<2x32xbf16>
    %cst_44 = arith.constant dense<0.000000e+00> : vector<2x128xf32>
    %244 = tpu.matmul %243, %168, %cst_44 {dimension_numbers = #tpu.dot_dimension_numbers<[1], [0], [0], [1], [0, 0, 1, 1], [], []>} : vector<2x32xbf16>, vector<32x128xbf16>, vector<2x128xf32> -> vector<2x128xf32>
    %245 = arith.addf %242, %244 : vector<2x128xf32>
    %246 = arith.negf %245 : vector<2x128xf32>
    %247 = math.exp %246 : vector<2x128xf32>
    %cst_45 = arith.constant 1.000000e+00 : f32
    %248 = vector.broadcast %cst_45 : f32 to vector<2x128xf32>
    %249 = arith.addf %248, %247 : vector<2x128xf32>
    %250 = arith.divf %248, %249 : vector<2x128xf32>
    %251 = math.tanh %245 : vector<2x128xf32>
    %252 = vector.extract_strided_slice %250 {offsets = [0, 0], sizes = [2, 32], strides = [1, 1]} : vector<2x128xf32> to vector<2x32xf32>
    %253 = vector.extract_strided_slice %250 {offsets = [0, 32], sizes = [2, 32], strides = [1, 1]} : vector<2x128xf32> to vector<2x32xf32>
    %254 = vector.extract_strided_slice %251 {offsets = [0, 64], sizes = [2, 32], strides = [1, 1]} : vector<2x128xf32> to vector<2x32xf32>
    %255 = vector.extract_strided_slice %250 {offsets = [0, 96], sizes = [2, 32], strides = [1, 1]} : vector<2x128xf32> to vector<2x32xf32>
    %256 = arith.mulf %253, %236 : vector<2x32xf32>
    %257 = arith.mulf %252, %254 : vector<2x32xf32>
    %258 = arith.addf %256, %257 : vector<2x32xf32>
    %259 = math.tanh %258 : vector<2x32xf32>
    %260 = arith.mulf %255, %259 : vector<2x32xf32>
    %261 = arith.truncf %107 : vector<2x32xf32> to vector<2x32xbf16>
    %cst_46 = arith.constant dense<0.000000e+00> : vector<2x128xf32>
    %262 = tpu.matmul %261, %166, %cst_46 {dimension_numbers = #tpu.dot_dimension_numbers<[1], [0], [0], [1], [0, 0, 1, 1], [], []>} : vector<2x32xbf16>, vector<32x128xbf16>, vector<2x128xf32> -> vector<2x128xf32>
    %263 = vector.broadcast %170 : vector<1x128xf32> to vector<2x128xf32>
    %264 = arith.addf %262, %263 : vector<2x128xf32>
    %265 = arith.truncf %260 : vector<2x32xf32> to vector<2x32xbf16>
    %cst_47 = arith.constant dense<0.000000e+00> : vector<2x128xf32>
    %266 = tpu.matmul %265, %168, %cst_47 {dimension_numbers = #tpu.dot_dimension_numbers<[1], [0], [0], [1], [0, 0, 1, 1], [], []>} : vector<2x32xbf16>, vector<32x128xbf16>, vector<2x128xf32> -> vector<2x128xf32>
    %267 = arith.addf %264, %266 : vector<2x128xf32>
    %268 = arith.negf %267 : vector<2x128xf32>
    %269 = math.exp %268 : vector<2x128xf32>
    %cst_48 = arith.constant 1.000000e+00 : f32
    %270 = vector.broadcast %cst_48 : f32 to vector<2x128xf32>
    %271 = arith.addf %270, %269 : vector<2x128xf32>
    %272 = arith.divf %270, %271 : vector<2x128xf32>
    %273 = math.tanh %267 : vector<2x128xf32>
    %274 = vector.extract_strided_slice %272 {offsets = [0, 0], sizes = [2, 32], strides = [1, 1]} : vector<2x128xf32> to vector<2x32xf32>
    %275 = vector.extract_strided_slice %272 {offsets = [0, 32], sizes = [2, 32], strides = [1, 1]} : vector<2x128xf32> to vector<2x32xf32>
    %276 = vector.extract_strided_slice %273 {offsets = [0, 64], sizes = [2, 32], strides = [1, 1]} : vector<2x128xf32> to vector<2x32xf32>
    %277 = vector.extract_strided_slice %272 {offsets = [0, 96], sizes = [2, 32], strides = [1, 1]} : vector<2x128xf32> to vector<2x32xf32>
    %278 = arith.mulf %275, %258 : vector<2x32xf32>
    %279 = arith.mulf %274, %276 : vector<2x32xf32>
    %280 = arith.addf %278, %279 : vector<2x32xf32>
    %281 = math.tanh %280 : vector<2x32xf32>
    %282 = arith.mulf %277, %281 : vector<2x32xf32>
    %283 = arith.truncf %126 : vector<2x32xf32> to vector<2x32xbf16>
    %cst_49 = arith.constant dense<0.000000e+00> : vector<2x128xf32>
    %284 = tpu.matmul %283, %166, %cst_49 {dimension_numbers = #tpu.dot_dimension_numbers<[1], [0], [0], [1], [0, 0, 1, 1], [], []>} : vector<2x32xbf16>, vector<32x128xbf16>, vector<2x128xf32> -> vector<2x128xf32>
    %285 = vector.broadcast %170 : vector<1x128xf32> to vector<2x128xf32>
    %286 = arith.addf %284, %285 : vector<2x128xf32>
    %287 = arith.truncf %282 : vector<2x32xf32> to vector<2x32xbf16>
    %cst_50 = arith.constant dense<0.000000e+00> : vector<2x128xf32>
    %288 = tpu.matmul %287, %168, %cst_50 {dimension_numbers = #tpu.dot_dimension_numbers<[1], [0], [0], [1], [0, 0, 1, 1], [], []>} : vector<2x32xbf16>, vector<32x128xbf16>, vector<2x128xf32> -> vector<2x128xf32>
    %289 = arith.addf %286, %288 : vector<2x128xf32>
    %290 = arith.negf %289 : vector<2x128xf32>
    %291 = math.exp %290 : vector<2x128xf32>
    %cst_51 = arith.constant 1.000000e+00 : f32
    %292 = vector.broadcast %cst_51 : f32 to vector<2x128xf32>
    %293 = arith.addf %292, %291 : vector<2x128xf32>
    %294 = arith.divf %292, %293 : vector<2x128xf32>
    %295 = math.tanh %289 : vector<2x128xf32>
    %296 = vector.extract_strided_slice %294 {offsets = [0, 0], sizes = [2, 32], strides = [1, 1]} : vector<2x128xf32> to vector<2x32xf32>
    %297 = vector.extract_strided_slice %294 {offsets = [0, 32], sizes = [2, 32], strides = [1, 1]} : vector<2x128xf32> to vector<2x32xf32>
    %298 = vector.extract_strided_slice %295 {offsets = [0, 64], sizes = [2, 32], strides = [1, 1]} : vector<2x128xf32> to vector<2x32xf32>
    %299 = vector.extract_strided_slice %294 {offsets = [0, 96], sizes = [2, 32], strides = [1, 1]} : vector<2x128xf32> to vector<2x32xf32>
    %300 = arith.mulf %297, %280 : vector<2x32xf32>
    %301 = arith.mulf %296, %298 : vector<2x32xf32>
    %302 = arith.addf %300, %301 : vector<2x32xf32>
    %303 = math.tanh %302 : vector<2x32xf32>
    %304 = arith.mulf %299, %303 : vector<2x32xf32>
    %305 = arith.truncf %145 : vector<2x32xf32> to vector<2x32xbf16>
    %cst_52 = arith.constant dense<0.000000e+00> : vector<2x128xf32>
    %306 = tpu.matmul %305, %166, %cst_52 {dimension_numbers = #tpu.dot_dimension_numbers<[1], [0], [0], [1], [0, 0, 1, 1], [], []>} : vector<2x32xbf16>, vector<32x128xbf16>, vector<2x128xf32> -> vector<2x128xf32>
    %307 = vector.broadcast %170 : vector<1x128xf32> to vector<2x128xf32>
    %308 = arith.addf %306, %307 : vector<2x128xf32>
    %309 = arith.truncf %304 : vector<2x32xf32> to vector<2x32xbf16>
    %cst_53 = arith.constant dense<0.000000e+00> : vector<2x128xf32>
    %310 = tpu.matmul %309, %168, %cst_53 {dimension_numbers = #tpu.dot_dimension_numbers<[1], [0], [0], [1], [0, 0, 1, 1], [], []>} : vector<2x32xbf16>, vector<32x128xbf16>, vector<2x128xf32> -> vector<2x128xf32>
    %311 = arith.addf %308, %310 : vector<2x128xf32>
    %312 = arith.negf %311 : vector<2x128xf32>
    %313 = math.exp %312 : vector<2x128xf32>
    %cst_54 = arith.constant 1.000000e+00 : f32
    %314 = vector.broadcast %cst_54 : f32 to vector<2x128xf32>
    %315 = arith.addf %314, %313 : vector<2x128xf32>
    %316 = arith.divf %314, %315 : vector<2x128xf32>
    %317 = math.tanh %311 : vector<2x128xf32>
    %318 = vector.extract_strided_slice %316 {offsets = [0, 0], sizes = [2, 32], strides = [1, 1]} : vector<2x128xf32> to vector<2x32xf32>
    %319 = vector.extract_strided_slice %316 {offsets = [0, 32], sizes = [2, 32], strides = [1, 1]} : vector<2x128xf32> to vector<2x32xf32>
    %320 = vector.extract_strided_slice %317 {offsets = [0, 64], sizes = [2, 32], strides = [1, 1]} : vector<2x128xf32> to vector<2x32xf32>
    %321 = vector.extract_strided_slice %316 {offsets = [0, 96], sizes = [2, 32], strides = [1, 1]} : vector<2x128xf32> to vector<2x32xf32>
    %322 = arith.mulf %319, %302 : vector<2x32xf32>
    %323 = arith.mulf %318, %320 : vector<2x32xf32>
    %324 = arith.addf %322, %323 : vector<2x32xf32>
    %325 = math.tanh %324 : vector<2x32xf32>
    %326 = arith.mulf %321, %325 : vector<2x32xf32>
    %327 = arith.truncf %164 : vector<2x32xf32> to vector<2x32xbf16>
    %cst_55 = arith.constant dense<0.000000e+00> : vector<2x128xf32>
    %328 = tpu.matmul %327, %166, %cst_55 {dimension_numbers = #tpu.dot_dimension_numbers<[1], [0], [0], [1], [0, 0, 1, 1], [], []>} : vector<2x32xbf16>, vector<32x128xbf16>, vector<2x128xf32> -> vector<2x128xf32>
    %329 = vector.broadcast %170 : vector<1x128xf32> to vector<2x128xf32>
    %330 = arith.addf %328, %329 : vector<2x128xf32>
    %331 = arith.truncf %326 : vector<2x32xf32> to vector<2x32xbf16>
    %cst_56 = arith.constant dense<0.000000e+00> : vector<2x128xf32>
    %332 = tpu.matmul %331, %168, %cst_56 {dimension_numbers = #tpu.dot_dimension_numbers<[1], [0], [0], [1], [0, 0, 1, 1], [], []>} : vector<2x32xbf16>, vector<32x128xbf16>, vector<2x128xf32> -> vector<2x128xf32>
    %333 = arith.addf %330, %332 : vector<2x128xf32>
    %334 = arith.negf %333 : vector<2x128xf32>
    %335 = math.exp %334 : vector<2x128xf32>
    %cst_57 = arith.constant 1.000000e+00 : f32
    %336 = vector.broadcast %cst_57 : f32 to vector<2x128xf32>
    %337 = arith.addf %336, %335 : vector<2x128xf32>
    %338 = arith.divf %336, %337 : vector<2x128xf32>
    %339 = math.tanh %333 : vector<2x128xf32>
    %340 = vector.extract_strided_slice %338 {offsets = [0, 0], sizes = [2, 32], strides = [1, 1]} : vector<2x128xf32> to vector<2x32xf32>
    %341 = vector.extract_strided_slice %338 {offsets = [0, 32], sizes = [2, 32], strides = [1, 1]} : vector<2x128xf32> to vector<2x32xf32>
    %342 = vector.extract_strided_slice %339 {offsets = [0, 64], sizes = [2, 32], strides = [1, 1]} : vector<2x128xf32> to vector<2x32xf32>
    %343 = vector.extract_strided_slice %338 {offsets = [0, 96], sizes = [2, 32], strides = [1, 1]} : vector<2x128xf32> to vector<2x32xf32>
    %344 = arith.mulf %341, %324 : vector<2x32xf32>
    %345 = arith.mulf %340, %342 : vector<2x32xf32>
    %346 = arith.addf %344, %345 : vector<2x32xf32>
    %347 = math.tanh %346 : vector<2x32xf32>
    %348 = arith.mulf %343, %347 : vector<2x32xf32>
    %c1_58 = arith.constant 1 : index
    %c0_59 = arith.constant 0 : index
    %c0_60 = arith.constant 0 : index
    %349 = vector.load %arg3[%c1_58, %c0_59, %c0_60] : memref<2x32x128xbf16, #tpu.memory_space<vmem>>, vector<1x32x128xbf16>
    %350 = vector.shape_cast %349 : vector<1x32x128xbf16> to vector<32x128xbf16>
    %c2 = arith.constant 2 : index
    %c0_61 = arith.constant 0 : index
    %c0_62 = arith.constant 0 : index
    %351 = vector.load %arg4[%c2, %c0_61, %c0_62] : memref<3x32x128xbf16, #tpu.memory_space<vmem>>, vector<1x32x128xbf16>
    %352 = vector.shape_cast %351 : vector<1x32x128xbf16> to vector<32x128xbf16>
    %c1_63 = arith.constant 1 : index
    %c0_64 = arith.constant 0 : index
    %c0_65 = arith.constant 0 : index
    %353 = vector.load %arg5[%c1_63, %c0_64, %c0_65] : memref<2x1x128xf32, #tpu.memory_space<vmem>>, vector<1x1x128xf32>
    %354 = vector.shape_cast %353 : vector<1x1x128xf32> to vector<1x128xf32>
    %cst_66 = arith.constant 0.000000e+00 : f32
    %355 = vector.broadcast %cst_66 : f32 to vector<2x32xf32>
    %cst_67 = arith.constant 0.000000e+00 : f32
    %356 = vector.broadcast %cst_67 : f32 to vector<2x32xf32>
    %357 = arith.truncf %194 : vector<2x32xf32> to vector<2x32xbf16>
    %cst_68 = arith.constant dense<0.000000e+00> : vector<2x128xf32>
    %358 = tpu.matmul %357, %350, %cst_68 {dimension_numbers = #tpu.dot_dimension_numbers<[1], [0], [0], [1], [0, 0, 1, 1], [], []>} : vector<2x32xbf16>, vector<32x128xbf16>, vector<2x128xf32> -> vector<2x128xf32>
    %359 = vector.broadcast %354 : vector<1x128xf32> to vector<2x128xf32>
    %360 = arith.addf %358, %359 : vector<2x128xf32>
    %361 = arith.truncf %355 : vector<2x32xf32> to vector<2x32xbf16>
    %cst_69 = arith.constant dense<0.000000e+00> : vector<2x128xf32>
    %362 = tpu.matmul %361, %352, %cst_69 {dimension_numbers = #tpu.dot_dimension_numbers<[1], [0], [0], [1], [0, 0, 1, 1], [], []>} : vector<2x32xbf16>, vector<32x128xbf16>, vector<2x128xf32> -> vector<2x128xf32>
    %363 = arith.addf %360, %362 : vector<2x128xf32>
    %364 = arith.negf %363 : vector<2x128xf32>
    %365 = math.exp %364 : vector<2x128xf32>
    %cst_70 = arith.constant 1.000000e+00 : f32
    %366 = vector.broadcast %cst_70 : f32 to vector<2x128xf32>
    %367 = arith.addf %366, %365 : vector<2x128xf32>
    %368 = arith.divf %366, %367 : vector<2x128xf32>
    %369 = math.tanh %363 : vector<2x128xf32>
    %370 = vector.extract_strided_slice %368 {offsets = [0, 0], sizes = [2, 32], strides = [1, 1]} : vector<2x128xf32> to vector<2x32xf32>
    %371 = vector.extract_strided_slice %368 {offsets = [0, 32], sizes = [2, 32], strides = [1, 1]} : vector<2x128xf32> to vector<2x32xf32>
    %372 = vector.extract_strided_slice %369 {offsets = [0, 64], sizes = [2, 32], strides = [1, 1]} : vector<2x128xf32> to vector<2x32xf32>
    %373 = vector.extract_strided_slice %368 {offsets = [0, 96], sizes = [2, 32], strides = [1, 1]} : vector<2x128xf32> to vector<2x32xf32>
    %374 = arith.mulf %371, %356 : vector<2x32xf32>
    %375 = arith.mulf %370, %372 : vector<2x32xf32>
    %376 = arith.addf %374, %375 : vector<2x32xf32>
    %377 = math.tanh %376 : vector<2x32xf32>
    %378 = arith.mulf %373, %377 : vector<2x32xf32>
    %379 = arith.truncf %216 : vector<2x32xf32> to vector<2x32xbf16>
    %cst_71 = arith.constant dense<0.000000e+00> : vector<2x128xf32>
    %380 = tpu.matmul %379, %350, %cst_71 {dimension_numbers = #tpu.dot_dimension_numbers<[1], [0], [0], [1], [0, 0, 1, 1], [], []>} : vector<2x32xbf16>, vector<32x128xbf16>, vector<2x128xf32> -> vector<2x128xf32>
    %381 = vector.broadcast %354 : vector<1x128xf32> to vector<2x128xf32>
    %382 = arith.addf %380, %381 : vector<2x128xf32>
    %383 = arith.truncf %378 : vector<2x32xf32> to vector<2x32xbf16>
    %cst_72 = arith.constant dense<0.000000e+00> : vector<2x128xf32>
    %384 = tpu.matmul %383, %352, %cst_72 {dimension_numbers = #tpu.dot_dimension_numbers<[1], [0], [0], [1], [0, 0, 1, 1], [], []>} : vector<2x32xbf16>, vector<32x128xbf16>, vector<2x128xf32> -> vector<2x128xf32>
    %385 = arith.addf %382, %384 : vector<2x128xf32>
    %386 = arith.negf %385 : vector<2x128xf32>
    %387 = math.exp %386 : vector<2x128xf32>
    %cst_73 = arith.constant 1.000000e+00 : f32
    %388 = vector.broadcast %cst_73 : f32 to vector<2x128xf32>
    %389 = arith.addf %388, %387 : vector<2x128xf32>
    %390 = arith.divf %388, %389 : vector<2x128xf32>
    %391 = math.tanh %385 : vector<2x128xf32>
    %392 = vector.extract_strided_slice %390 {offsets = [0, 0], sizes = [2, 32], strides = [1, 1]} : vector<2x128xf32> to vector<2x32xf32>
    %393 = vector.extract_strided_slice %390 {offsets = [0, 32], sizes = [2, 32], strides = [1, 1]} : vector<2x128xf32> to vector<2x32xf32>
    %394 = vector.extract_strided_slice %391 {offsets = [0, 64], sizes = [2, 32], strides = [1, 1]} : vector<2x128xf32> to vector<2x32xf32>
    %395 = vector.extract_strided_slice %390 {offsets = [0, 96], sizes = [2, 32], strides = [1, 1]} : vector<2x128xf32> to vector<2x32xf32>
    %396 = arith.mulf %393, %376 : vector<2x32xf32>
    %397 = arith.mulf %392, %394 : vector<2x32xf32>
    %398 = arith.addf %396, %397 : vector<2x32xf32>
    %399 = math.tanh %398 : vector<2x32xf32>
    %400 = arith.mulf %395, %399 : vector<2x32xf32>
    %401 = arith.truncf %238 : vector<2x32xf32> to vector<2x32xbf16>
    %cst_74 = arith.constant dense<0.000000e+00> : vector<2x128xf32>
    %402 = tpu.matmul %401, %350, %cst_74 {dimension_numbers = #tpu.dot_dimension_numbers<[1], [0], [0], [1], [0, 0, 1, 1], [], []>} : vector<2x32xbf16>, vector<32x128xbf16>, vector<2x128xf32> -> vector<2x128xf32>
    %403 = vector.broadcast %354 : vector<1x128xf32> to vector<2x128xf32>
    %404 = arith.addf %402, %403 : vector<2x128xf32>
    %405 = arith.truncf %400 : vector<2x32xf32> to vector<2x32xbf16>
    %cst_75 = arith.constant dense<0.000000e+00> : vector<2x128xf32>
    %406 = tpu.matmul %405, %352, %cst_75 {dimension_numbers = #tpu.dot_dimension_numbers<[1], [0], [0], [1], [0, 0, 1, 1], [], []>} : vector<2x32xbf16>, vector<32x128xbf16>, vector<2x128xf32> -> vector<2x128xf32>
    %407 = arith.addf %404, %406 : vector<2x128xf32>
    %408 = arith.negf %407 : vector<2x128xf32>
    %409 = math.exp %408 : vector<2x128xf32>
    %cst_76 = arith.constant 1.000000e+00 : f32
    %410 = vector.broadcast %cst_76 : f32 to vector<2x128xf32>
    %411 = arith.addf %410, %409 : vector<2x128xf32>
    %412 = arith.divf %410, %411 : vector<2x128xf32>
    %413 = math.tanh %407 : vector<2x128xf32>
    %414 = vector.extract_strided_slice %412 {offsets = [0, 0], sizes = [2, 32], strides = [1, 1]} : vector<2x128xf32> to vector<2x32xf32>
    %415 = vector.extract_strided_slice %412 {offsets = [0, 32], sizes = [2, 32], strides = [1, 1]} : vector<2x128xf32> to vector<2x32xf32>
    %416 = vector.extract_strided_slice %413 {offsets = [0, 64], sizes = [2, 32], strides = [1, 1]} : vector<2x128xf32> to vector<2x32xf32>
    %417 = vector.extract_strided_slice %412 {offsets = [0, 96], sizes = [2, 32], strides = [1, 1]} : vector<2x128xf32> to vector<2x32xf32>
    %418 = arith.mulf %415, %398 : vector<2x32xf32>
    %419 = arith.mulf %414, %416 : vector<2x32xf32>
    %420 = arith.addf %418, %419 : vector<2x32xf32>
    %421 = math.tanh %420 : vector<2x32xf32>
    %422 = arith.mulf %417, %421 : vector<2x32xf32>
    %423 = arith.truncf %260 : vector<2x32xf32> to vector<2x32xbf16>
    %cst_77 = arith.constant dense<0.000000e+00> : vector<2x128xf32>
    %424 = tpu.matmul %423, %350, %cst_77 {dimension_numbers = #tpu.dot_dimension_numbers<[1], [0], [0], [1], [0, 0, 1, 1], [], []>} : vector<2x32xbf16>, vector<32x128xbf16>, vector<2x128xf32> -> vector<2x128xf32>
    %425 = vector.broadcast %354 : vector<1x128xf32> to vector<2x128xf32>
    %426 = arith.addf %424, %425 : vector<2x128xf32>
    %427 = arith.truncf %422 : vector<2x32xf32> to vector<2x32xbf16>
    %cst_78 = arith.constant dense<0.000000e+00> : vector<2x128xf32>
    %428 = tpu.matmul %427, %352, %cst_78 {dimension_numbers = #tpu.dot_dimension_numbers<[1], [0], [0], [1], [0, 0, 1, 1], [], []>} : vector<2x32xbf16>, vector<32x128xbf16>, vector<2x128xf32> -> vector<2x128xf32>
    %429 = arith.addf %426, %428 : vector<2x128xf32>
    %430 = arith.negf %429 : vector<2x128xf32>
    %431 = math.exp %430 : vector<2x128xf32>
    %cst_79 = arith.constant 1.000000e+00 : f32
    %432 = vector.broadcast %cst_79 : f32 to vector<2x128xf32>
    %433 = arith.addf %432, %431 : vector<2x128xf32>
    %434 = arith.divf %432, %433 : vector<2x128xf32>
    %435 = math.tanh %429 : vector<2x128xf32>
    %436 = vector.extract_strided_slice %434 {offsets = [0, 0], sizes = [2, 32], strides = [1, 1]} : vector<2x128xf32> to vector<2x32xf32>
    %437 = vector.extract_strided_slice %434 {offsets = [0, 32], sizes = [2, 32], strides = [1, 1]} : vector<2x128xf32> to vector<2x32xf32>
    %438 = vector.extract_strided_slice %435 {offsets = [0, 64], sizes = [2, 32], strides = [1, 1]} : vector<2x128xf32> to vector<2x32xf32>
    %439 = vector.extract_strided_slice %434 {offsets = [0, 96], sizes = [2, 32], strides = [1, 1]} : vector<2x128xf32> to vector<2x32xf32>
    %440 = arith.mulf %437, %420 : vector<2x32xf32>
    %441 = arith.mulf %436, %438 : vector<2x32xf32>
    %442 = arith.addf %440, %441 : vector<2x32xf32>
    %443 = math.tanh %442 : vector<2x32xf32>
    %444 = arith.mulf %439, %443 : vector<2x32xf32>
    %445 = arith.truncf %282 : vector<2x32xf32> to vector<2x32xbf16>
    %cst_80 = arith.constant dense<0.000000e+00> : vector<2x128xf32>
    %446 = tpu.matmul %445, %350, %cst_80 {dimension_numbers = #tpu.dot_dimension_numbers<[1], [0], [0], [1], [0, 0, 1, 1], [], []>} : vector<2x32xbf16>, vector<32x128xbf16>, vector<2x128xf32> -> vector<2x128xf32>
    %447 = vector.broadcast %354 : vector<1x128xf32> to vector<2x128xf32>
    %448 = arith.addf %446, %447 : vector<2x128xf32>
    %449 = arith.truncf %444 : vector<2x32xf32> to vector<2x32xbf16>
    %cst_81 = arith.constant dense<0.000000e+00> : vector<2x128xf32>
    %450 = tpu.matmul %449, %352, %cst_81 {dimension_numbers = #tpu.dot_dimension_numbers<[1], [0], [0], [1], [0, 0, 1, 1], [], []>} : vector<2x32xbf16>, vector<32x128xbf16>, vector<2x128xf32> -> vector<2x128xf32>
    %451 = arith.addf %448, %450 : vector<2x128xf32>
    %452 = arith.negf %451 : vector<2x128xf32>
    %453 = math.exp %452 : vector<2x128xf32>
    %cst_82 = arith.constant 1.000000e+00 : f32
    %454 = vector.broadcast %cst_82 : f32 to vector<2x128xf32>
    %455 = arith.addf %454, %453 : vector<2x128xf32>
    %456 = arith.divf %454, %455 : vector<2x128xf32>
    %457 = math.tanh %451 : vector<2x128xf32>
    %458 = vector.extract_strided_slice %456 {offsets = [0, 0], sizes = [2, 32], strides = [1, 1]} : vector<2x128xf32> to vector<2x32xf32>
    %459 = vector.extract_strided_slice %456 {offsets = [0, 32], sizes = [2, 32], strides = [1, 1]} : vector<2x128xf32> to vector<2x32xf32>
    %460 = vector.extract_strided_slice %457 {offsets = [0, 64], sizes = [2, 32], strides = [1, 1]} : vector<2x128xf32> to vector<2x32xf32>
    %461 = vector.extract_strided_slice %456 {offsets = [0, 96], sizes = [2, 32], strides = [1, 1]} : vector<2x128xf32> to vector<2x32xf32>
    %462 = arith.mulf %459, %442 : vector<2x32xf32>
    %463 = arith.mulf %458, %460 : vector<2x32xf32>
    %464 = arith.addf %462, %463 : vector<2x32xf32>
    %465 = math.tanh %464 : vector<2x32xf32>
    %466 = arith.mulf %461, %465 : vector<2x32xf32>
    %467 = arith.truncf %304 : vector<2x32xf32> to vector<2x32xbf16>
    %cst_83 = arith.constant dense<0.000000e+00> : vector<2x128xf32>
    %468 = tpu.matmul %467, %350, %cst_83 {dimension_numbers = #tpu.dot_dimension_numbers<[1], [0], [0], [1], [0, 0, 1, 1], [], []>} : vector<2x32xbf16>, vector<32x128xbf16>, vector<2x128xf32> -> vector<2x128xf32>
    %469 = vector.broadcast %354 : vector<1x128xf32> to vector<2x128xf32>
    %470 = arith.addf %468, %469 : vector<2x128xf32>
    %471 = arith.truncf %466 : vector<2x32xf32> to vector<2x32xbf16>
    %cst_84 = arith.constant dense<0.000000e+00> : vector<2x128xf32>
    %472 = tpu.matmul %471, %352, %cst_84 {dimension_numbers = #tpu.dot_dimension_numbers<[1], [0], [0], [1], [0, 0, 1, 1], [], []>} : vector<2x32xbf16>, vector<32x128xbf16>, vector<2x128xf32> -> vector<2x128xf32>
    %473 = arith.addf %470, %472 : vector<2x128xf32>
    %474 = arith.negf %473 : vector<2x128xf32>
    %475 = math.exp %474 : vector<2x128xf32>
    %cst_85 = arith.constant 1.000000e+00 : f32
    %476 = vector.broadcast %cst_85 : f32 to vector<2x128xf32>
    %477 = arith.addf %476, %475 : vector<2x128xf32>
    %478 = arith.divf %476, %477 : vector<2x128xf32>
    %479 = math.tanh %473 : vector<2x128xf32>
    %480 = vector.extract_strided_slice %478 {offsets = [0, 0], sizes = [2, 32], strides = [1, 1]} : vector<2x128xf32> to vector<2x32xf32>
    %481 = vector.extract_strided_slice %478 {offsets = [0, 32], sizes = [2, 32], strides = [1, 1]} : vector<2x128xf32> to vector<2x32xf32>
    %482 = vector.extract_strided_slice %479 {offsets = [0, 64], sizes = [2, 32], strides = [1, 1]} : vector<2x128xf32> to vector<2x32xf32>
    %483 = vector.extract_strided_slice %478 {offsets = [0, 96], sizes = [2, 32], strides = [1, 1]} : vector<2x128xf32> to vector<2x32xf32>
    %484 = arith.mulf %481, %464 : vector<2x32xf32>
    %485 = arith.mulf %480, %482 : vector<2x32xf32>
    %486 = arith.addf %484, %485 : vector<2x32xf32>
    %487 = math.tanh %486 : vector<2x32xf32>
    %488 = arith.mulf %483, %487 : vector<2x32xf32>
    %489 = arith.truncf %326 : vector<2x32xf32> to vector<2x32xbf16>
    %cst_86 = arith.constant dense<0.000000e+00> : vector<2x128xf32>
    %490 = tpu.matmul %489, %350, %cst_86 {dimension_numbers = #tpu.dot_dimension_numbers<[1], [0], [0], [1], [0, 0, 1, 1], [], []>} : vector<2x32xbf16>, vector<32x128xbf16>, vector<2x128xf32> -> vector<2x128xf32>
    %491 = vector.broadcast %354 : vector<1x128xf32> to vector<2x128xf32>
    %492 = arith.addf %490, %491 : vector<2x128xf32>
    %493 = arith.truncf %488 : vector<2x32xf32> to vector<2x32xbf16>
    %cst_87 = arith.constant dense<0.000000e+00> : vector<2x128xf32>
    %494 = tpu.matmul %493, %352, %cst_87 {dimension_numbers = #tpu.dot_dimension_numbers<[1], [0], [0], [1], [0, 0, 1, 1], [], []>} : vector<2x32xbf16>, vector<32x128xbf16>, vector<2x128xf32> -> vector<2x128xf32>
    %495 = arith.addf %492, %494 : vector<2x128xf32>
    %496 = arith.negf %495 : vector<2x128xf32>
    %497 = math.exp %496 : vector<2x128xf32>
    %cst_88 = arith.constant 1.000000e+00 : f32
    %498 = vector.broadcast %cst_88 : f32 to vector<2x128xf32>
    %499 = arith.addf %498, %497 : vector<2x128xf32>
    %500 = arith.divf %498, %499 : vector<2x128xf32>
    %501 = math.tanh %495 : vector<2x128xf32>
    %502 = vector.extract_strided_slice %500 {offsets = [0, 0], sizes = [2, 32], strides = [1, 1]} : vector<2x128xf32> to vector<2x32xf32>
    %503 = vector.extract_strided_slice %500 {offsets = [0, 32], sizes = [2, 32], strides = [1, 1]} : vector<2x128xf32> to vector<2x32xf32>
    %504 = vector.extract_strided_slice %501 {offsets = [0, 64], sizes = [2, 32], strides = [1, 1]} : vector<2x128xf32> to vector<2x32xf32>
    %505 = vector.extract_strided_slice %500 {offsets = [0, 96], sizes = [2, 32], strides = [1, 1]} : vector<2x128xf32> to vector<2x32xf32>
    %506 = arith.mulf %503, %486 : vector<2x32xf32>
    %507 = arith.mulf %502, %504 : vector<2x32xf32>
    %508 = arith.addf %506, %507 : vector<2x32xf32>
    %509 = math.tanh %508 : vector<2x32xf32>
    %510 = arith.mulf %505, %509 : vector<2x32xf32>
    %511 = arith.truncf %348 : vector<2x32xf32> to vector<2x32xbf16>
    %cst_89 = arith.constant dense<0.000000e+00> : vector<2x128xf32>
    %512 = tpu.matmul %511, %350, %cst_89 {dimension_numbers = #tpu.dot_dimension_numbers<[1], [0], [0], [1], [0, 0, 1, 1], [], []>} : vector<2x32xbf16>, vector<32x128xbf16>, vector<2x128xf32> -> vector<2x128xf32>
    %513 = vector.broadcast %354 : vector<1x128xf32> to vector<2x128xf32>
    %514 = arith.addf %512, %513 : vector<2x128xf32>
    %515 = arith.truncf %510 : vector<2x32xf32> to vector<2x32xbf16>
    %cst_90 = arith.constant dense<0.000000e+00> : vector<2x128xf32>
    %516 = tpu.matmul %515, %352, %cst_90 {dimension_numbers = #tpu.dot_dimension_numbers<[1], [0], [0], [1], [0, 0, 1, 1], [], []>} : vector<2x32xbf16>, vector<32x128xbf16>, vector<2x128xf32> -> vector<2x128xf32>
    %517 = arith.addf %514, %516 : vector<2x128xf32>
    %518 = arith.negf %517 : vector<2x128xf32>
    %519 = math.exp %518 : vector<2x128xf32>
    %cst_91 = arith.constant 1.000000e+00 : f32
    %520 = vector.broadcast %cst_91 : f32 to vector<2x128xf32>
    %521 = arith.addf %520, %519 : vector<2x128xf32>
    %522 = arith.divf %520, %521 : vector<2x128xf32>
    %523 = math.tanh %517 : vector<2x128xf32>
    %524 = vector.extract_strided_slice %522 {offsets = [0, 0], sizes = [2, 32], strides = [1, 1]} : vector<2x128xf32> to vector<2x32xf32>
    %525 = vector.extract_strided_slice %522 {offsets = [0, 32], sizes = [2, 32], strides = [1, 1]} : vector<2x128xf32> to vector<2x32xf32>
    %526 = vector.extract_strided_slice %523 {offsets = [0, 64], sizes = [2, 32], strides = [1, 1]} : vector<2x128xf32> to vector<2x32xf32>
    %527 = vector.extract_strided_slice %522 {offsets = [0, 96], sizes = [2, 32], strides = [1, 1]} : vector<2x128xf32> to vector<2x32xf32>
    %528 = arith.mulf %525, %508 : vector<2x32xf32>
    %529 = arith.mulf %524, %526 : vector<2x32xf32>
    %530 = arith.addf %528, %529 : vector<2x32xf32>
    %531 = math.tanh %530 : vector<2x32xf32>
    %532 = arith.mulf %527, %531 : vector<2x32xf32>
    %533 = arith.truncf %532 : vector<2x32xf32> to vector<2x32xbf16>
    %c0_92 = arith.constant 0 : index
    %c0_93 = arith.constant 0 : index
    %534 = vector.load %arg6[%c0_92, %c0_93] : memref<32x10xbf16, #tpu.memory_space<vmem>>, vector<32x10xbf16>
    %cst_94 = arith.constant dense<0.000000e+00> : vector<2x10xf32>
    %535 = tpu.matmul %533, %534, %cst_94 {dimension_numbers = #tpu.dot_dimension_numbers<[1], [0], [0], [1], [0, 0, 1, 1], [], []>} : vector<2x32xbf16>, vector<32x10xbf16>, vector<2x10xf32> -> vector<2x10xf32>
    %c0_95 = arith.constant 0 : index
    %c0_96 = arith.constant 0 : index
    %536 = vector.load %arg7[%c0_95, %c0_96] : memref<1x10xf32, #tpu.memory_space<vmem>>, vector<1x10xf32>
    %537 = vector.broadcast %536 : vector<1x10xf32> to vector<2x10xf32>
    %538 = arith.addf %535, %537 : vector<2x10xf32>
    %c0_97 = arith.constant 0 : index
    %c0_98 = arith.constant 0 : index
    %539 = vector.load %arg8[%c0_97, %c0_98] : memref<2x10xf32, #tpu.memory_space<vmem>>, vector<2x10xf32>
    tpu.vector_store %arg8[%c0_97, %c0_98], %538 {strides = array<i32>} : memref<2x10xf32, #tpu.memory_space<vmem>>, vector<2x10xf32>,
    return
  }
  func.func @transform_0(%arg0: i32) -> (i32, i32) {
    %c0_i32 = arith.constant 0 : i32
    %c0_i32_0 = arith.constant 0 : i32
    %c0_i32_1 = arith.constant 0 : i32
    return %c0_i32, %c0_i32_0 : i32, i32
  }
  func.func @transform_1(%arg0: i32) -> (i32, i32) {
    %c0_i32 = arith.constant 0 : i32
    %c0_i32_0 = arith.constant 0 : i32
    %c0_i32_1 = arith.constant 0 : i32
    return %c0_i32, %c0_i32_0 : i32, i32
  }
  func.func @transform_2(%arg0: i32) -> (i32, i32, i32) {
    %c0_i32 = arith.constant 0 : i32
    %c0_i32_0 = arith.constant 0 : i32
    %c0_i32_1 = arith.constant 0 : i32
    %c0_i32_2 = arith.constant 0 : i32
    return %c0_i32, %c0_i32_0, %c0_i32_1 : i32, i32, i32
  }
  func.func @transform_3(%arg0: i32) -> (i32, i32, i32) {
    %c0_i32 = arith.constant 0 : i32
    %c0_i32_0 = arith.constant 0 : i32
    %c0_i32_1 = arith.constant 0 : i32
    %c0_i32_2 = arith.constant 0 : i32
    return %c0_i32, %c0_i32_0, %c0_i32_1 : i32, i32, i32
  }
  func.func @transform_4(%arg0: i32) -> (i32, i32, i32) {
    %c0_i32 = arith.constant 0 : i32
    %c0_i32_0 = arith.constant 0 : i32
    %c0_i32_1 = arith.constant 0 : i32
    %c0_i32_2 = arith.constant 0 : i32
    return %c0_i32, %c0_i32_0, %c0_i32_1 : i32, i32, i32
  }
  func.func @transform_5(%arg0: i32) -> (i32, i32) {
    %c0_i32 = arith.constant 0 : i32
    %c0_i32_0 = arith.constant 0 : i32
    %c0_i32_1 = arith.constant 0 : i32
    return %c0_i32, %c0_i32_0 : i32, i32
  }
  func.func @transform_6(%arg0: i32) -> (i32, i32) {
    %c0_i32 = arith.constant 0 : i32
    %c0_i32_0 = arith.constant 0 : i32
    %c0_i32_1 = arith.constant 0 : i32
    return %c0_i32, %c0_i32_0 : i32, i32
  }
  func.func @transform_7(%arg0: i32) -> (i32, i32) {
    %c0_i32 = arith.constant 0 : i32
    %c0_i32_0 = arith.constant 0 : i32
    %c0_i32_1 = arith.constant 0 : i32
    return %c0_i32, %c0_i32_0 : i32, i32
  }
}

</mosaic_0001>

<llo_original>
// kernel: lstm_classifier_forward.1
$region0: #{lstm_classifier_forward.1}
  #allocation0 [shape = 'u32[]', space=smem, size = 0x4, offset = 0x4, fixed_abs, tag = 'smem constant byte address 0x4 - core index']
  #allocation1 [shape = 'u32[72,128]{1,0:T(1,128)}', space=vmem, size = 0x9000, scoped, tag = 'internal scratch']
  %s0 = inlined_call_operand.vmem [shape: s32[16,1], index: 0, kind: input, shape index: {}]
  %s1 = inlined_call_operand.hbm [shape: bf16[128,128], index: 1, kind: input, shape index: {}]
  %s2 = inlined_call_operand.vmem [shape: bf16[2,32,128], index: 2, kind: input, shape index: {}]
  %s3 = inlined_call_operand.hbm [shape: bf16[3,32,128], index: 3, kind: input, shape index: {}]
  %s4 = inlined_call_operand.vmem [shape: f32[2,1,128], index: 4, kind: input, shape index: {}]
  %s5 = inlined_call_operand.vmem [shape: bf16[32,10], index: 5, kind: input, shape index: {}]
  %s6 = inlined_call_operand.vmem [shape: f32[1,10], index: 6, kind: input, shape index: {}]
  %s7 = inlined_call_operand.hbm [shape: f32[2,10], index: 7, kind: output, shape index: {}]
  %s8 = sld [smem:[#allocation0]]
  $region46: #{lstm_classifier_forward.1} parent=0
    _
  %s10 = ssub.s32 1, %s8
  %s11 = scalar_select 0, %s10, %s8
  $region1: #{lstm_classifier_forward.1} parent=0
    #allocation2 [shape = 'u8[32768]{0}', space=vmem, size = 0x8000, scoped, tag = 'input window, operand 1, single buffered']
    #allocation3 [shape = 's32[1]{0}', space=sflag, size = 0x4, scoped, tag = 'scoped memory for lstm_classifier_forward.1']
    #allocation4 [shape = 's32[1]{0}', space=sflag, size = 0x4, scoped, tag = 'scoped memory for lstm_classifier_forward.1']
    #allocation5 [shape = 'u8[24576]{0}', space=vmem, size = 0x6000, scoped, tag = 'input window, operand 3, single buffered']
    #allocation6 [shape = 's32[1]{0}', space=sflag, size = 0x4, scoped, tag = 'scoped memory for lstm_classifier_forward.1']
    #allocation7 [shape = 'u8[1024]{0}', space=vmem, size = 0x400, scoped, tag = 'output window, operand 0, single buffered']
    %12 = vsyncpa [#allocation3], 0
    %13 = vsyncpa [#allocation6], 0
    %14 = vsyncpa [#allocation4], 0
    // Predicated region
    $region2: #{lstm_classifier_forward.1} parent=1 // pred_check
      _
    $region3: #{lstm_classifier_forward.1} parent=1 // pred_check_branch
      %16 = sbr.rel (0) target = $region5
    $region4: #{lstm_classifier_forward.1} parent=1 // pred_region
      _
    $region5: #{lstm_classifier_forward.1} parent=1 // pred_fallthru
      _
    // Predicated region
    $region6: #{lstm_classifier_forward.1} parent=1 // pred_check
      _
    $region7: #{lstm_classifier_forward.1} parent=1 // pred_check_branch
      %18 = sbr.rel (0) target = $region9
    $region8: #{lstm_classifier_forward.1} parent=1 // pred_region
      %20 = vsyncadd [#allocation3], 0
      %s21 = sshll.u32 %s1, 4
      %s22 = int_to_ptr.hbm [resolvable:$true] %s21
      %s23 = sshll.u32 [#allocation2], 4
      %s24 = int_to_ptr.vmem [resolvable:$true] %s23
      %29 = dma.hbm_to_vmem [thread:$0]  %s22, 1024, %s24, [#allocation3], 64, 64, 4
    $region9: #{lstm_classifier_forward.1} parent=1 // pred_fallthru
      _
    // Predicated region
    $region10: #{lstm_classifier_forward.1} parent=1 // pred_check
      _
    $region11: #{lstm_classifier_forward.1} parent=1 // pred_check_branch
      %31 = sbr.rel (0) target = $region13
    $region12: #{lstm_classifier_forward.1} parent=1 // pred_region
      _
    $region13: #{lstm_classifier_forward.1} parent=1 // pred_fallthru
      _
    // Predicated region
    $region14: #{lstm_classifier_forward.1} parent=1 // pred_check
      _
    $region15: #{lstm_classifier_forward.1} parent=1 // pred_check_branch
      %33 = sbr.rel (0) target = $region17
    $region16: #{lstm_classifier_forward.1} parent=1 // pred_region
      %35 = vsyncadd [#allocation6], 0
      %s36 = sshll.u32 %s3, 4
      %s37 = int_to_ptr.hbm [resolvable:$true] %s36
      %s38 = sshll.u32 [#allocation5], 4
      %s39 = int_to_ptr.vmem [resolvable:$true] %s38
      %44 = dma.hbm_to_vmem [thread:$0]  %s37, 768, %s39, [#allocation6], 64, 64, 4
    $region17: #{lstm_classifier_forward.1} parent=1 // pred_fallthru
      _
    // Predicated region
    $region18: #{lstm_classifier_forward.1} parent=1 // pred_check
      _
    $region19: #{lstm_classifier_forward.1} parent=1 // pred_check_branch
      %46 = sbr.rel (0) target = $region21
    $region20: #{lstm_classifier_forward.1} parent=1 // pred_region
      _
    $region21: #{lstm_classifier_forward.1} parent=1 // pred_fallthru
      _
    // Predicated region
    $region22: #{lstm_classifier_forward.1} parent=1 // pred_check
      _
    $region23: #{lstm_classifier_forward.1} parent=1 // pred_check_branch
      %48 = sbr.rel (0) target = $region25
    $region24: #{lstm_classifier_forward.1} parent=1 // pred_region
      _
    $region25: #{lstm_classifier_forward.1} parent=1 // pred_fallthru
      _
    // Predicated region
    $region26: #{lstm_classifier_forward.1} parent=1 // pred_check
      _
    $region27: #{lstm_classifier_forward.1} parent=1 // pred_check_branch
      %50 = sbr.rel (0) target = $region29
    $region28: #{lstm_classifier_forward.1} parent=1 // pred_region
      _
    $region29: #{lstm_classifier_forward.1} parent=1 // pred_fallthru
      _
    // Predicated region
    $region30: #{lstm_classifier_forward.1} parent=1 // pred_check
      _
    $region31: #{lstm_classifier_forward.1} parent=1 // pred_check_branch
      %52 = sbr.rel (0) target = $region33
    $region32: #{lstm_classifier_forward.1} parent=1 // pred_region
      %54 = dma.done [#allocation3], 1024
    $region33: #{lstm_classifier_forward.1} parent=1 // pred_fallthru
      _
    // Predicated region
    $region34: #{lstm_classifier_forward.1} parent=1 // pred_check
      _
    $region35: #{lstm_classifier_forward.1} parent=1 // pred_check_branch
      %56 = sbr.rel (0) target = $region37
    $region36: #{lstm_classifier_forward.1} parent=1 // pred_region
      %58 = dma.done [#allocation6], 768
    $region37: #{lstm_classifier_forward.1} parent=1 // pred_fallthru
      _
    %v60 = vld [vmem:[%s0] sm:$0xff]
    %v61 = vld [vmem:[%s0 + $0x8] sm:$0xff]
    %v62 = vlaneseq
    %v63 = vand.u32 %v62, 127
    %64 = vset.pattern.permute.xlu0 0
    %65 = vperm.xlu0 %64, %v60
    %v66 = vpop.permute.xlu0 %65
    %67 = vset.pattern.permute.xlu0 0
    %68 = vperm.xlu0 %67, %v61
    %v69 = vpop.permute.xlu0 %68
    %vm70 = vcmp.eq.s32.totalorder %v63, %v66
    %vm71 = vcmp.eq.s32.totalorder %v63, %v69
    %v72 = vsel %vm70, 1, 0
    %v73 = vsel %vm71, 1, 0
    %v74 = vcvt.s32.f32 %v72
    %v75 = vcvt.s32.f32 %v73
    %v76 = vpack.c.bf16 %v75, %v74
    %v77 = vld [vmem:[#allocation2] sm:$0xf]
    %v78 = vld [vmem:[#allocation2 + $0x4] sm:$0xf]
    %v79 = vld [vmem:[#allocation2 + $0x8] sm:$0xf]
    %v80 = vld [vmem:[#allocation2 + $0xc] sm:$0xf]
    %v81 = vld [vmem:[#allocation2 + $0x10] sm:$0xf]
    %v82 = vld [vmem:[#allocation2 + $0x14] sm:$0xf]
    %v83 = vld [vmem:[#allocation2 + $0x18] sm:$0xf]
    %v84 = vld [vmem:[#allocation2 + $0x1c] sm:$0xf]
    %v85 = vld [vmem:[#allocation2 + $0x20] sm:$0xf]
    %v86 = vld [vmem:[#allocation2 + $0x24] sm:$0xf]
    %v87 = vld [vmem:[#allocation2 + $0x28] sm:$0xf]
    %v88 = vld [vmem:[#allocation2 + $0x2c] sm:$0xf]
    %v89 = vld [vmem:[#allocation2 + $0x30] sm:$0xf]
    %v90 = vld [vmem:[#allocation2 + $0x34] sm:$0xf]
    %v91 = vld [vmem:[#allocation2 + $0x38] sm:$0xf]
    %v92 = vld [vmem:[#allocation2 + $0x3c] sm:$0xf]
    %v109 = vunpack.c.l.b16 %v77
    %v110 = vunpack.c.l.b16 %v78
    %v111 = vunpack.c.l.b16 %v79
    %v112 = vunpack.c.l.b16 %v80
    %v113 = vunpack.c.l.b16 %v81
    %v114 = vunpack.c.l.b16 %v82
    %v115 = vunpack.c.l.b16 %v83
    %v116 = vunpack.c.l.b16 %v84
    %v117 = vunpack.c.l.b16 %v85
    %v118 = vunpack.c.l.b16 %v86
    %v119 = vunpack.c.l.b16 %v87
    %v120 = vunpack.c.l.b16 %v88
    %v121 = vunpack.c.l.b16 %v89
    %v122 = vunpack.c.l.b16 %v90
    %v123 = vunpack.c.l.b16 %v91
    %v124 = vunpack.c.l.b16 %v92
    %v125 = vpack.c.b16 %v110, %v109
    %v126 = vpack.c.b16 %v112, %v111
    %v127 = vpack.c.b16 %v114, %v113
    %v128 = vpack.c.b16 %v116, %v115
    %v129 = vpack.c.b16 %v118, %v117
    %v130 = vpack.c.b16 %v120, %v119
    %v131 = vpack.c.b16 %v122, %v121
    %v132 = vpack.c.b16 %v124, %v123
    %141 = vmatpush.bf16.msra.mxu0 %v132
    %142 = vmatpush.bf16.msra.mxu0 %v131
    %143 = vmatpush.bf16.msra.mxu0 %v130
    %144 = vmatpush.bf16.msra.mxu0 %v129
    %145 = vmatpush.bf16.msra.mxu0 %v128
    %146 = vmatpush.bf16.msra.mxu0 %v127
    %147 = vmatpush.bf16.msra.mxu0 %v126
    %148 = vmatpush.bf16.msra.mxu0 %v125
    %149 = vmatmul.bf16.gmra.mxu0 %v76
    %v150 = vpop.f32.mrf.mxu0
    %v151 = vadd.f32 0.0, %v150
    %v152 = vpop.f32.mrf.mxu0
    %v153 = vadd.f32 0.0, %v152
    %154 = vdwg.mxu0
    %v155 = vld [vmem:[#allocation5] sm:$0xf]
    %v156 = vld [vmem:[#allocation5 + $0x4] sm:$0xf]
    %v157 = vld [vmem:[#allocation5 + $0x8] sm:$0xf]
    %v158 = vld [vmem:[#allocation5 + $0xc] sm:$0xf]
    %v163 = vunpack.c.l.b16 %v155
    %v164 = vunpack.c.l.b16 %v156
    %v165 = vunpack.c.l.b16 %v157
    %v166 = vunpack.c.l.b16 %v158
    %v167 = vpack.c.b16 %v164, %v163
    %v168 = vpack.c.b16 %v166, %v165
    %vm171 = vcmask 261120
    %v173 = vsel %vm171, 0, 0
    %175 = vmatpush.bf16.msra.mxu0 0
    %176 = vmatpush.bf16.msra.mxu0 0
    %177 = vmatpush.bf16.msra.mxu0 0
    %178 = vmatpush.bf16.msra.mxu0 0
    %179 = vmatpush.bf16.msra.mxu0 0
    %180 = vmatpush.bf16.msra.mxu0 0
    %181 = vmatpush.bf16.msra.mxu0 %v168
    %182 = vmatpush.bf16.msra.mxu0 %v167
    %183 = vmatmul.bf16.gmra.mxu0 %v173
    %v184 = vpop.f32.mrf.mxu0
    %v185 = vadd.f32 0.0, %v184
    %v186 = vpop.f32.mrf.mxu0
    %187 = vdwg.mxu0
    %v188 = vadd.f32 %v151, %v185
    %v189 = vxor.u32 %v188, 2147483648
    %v190 = vmul.f32 %v189, 1.442695
    %v191 = vpow.pop %v190
    %v192 = vadd.f32 %v191, 1.0
    %v193 = vrcp.pop %v192
    %v194 = vmul.f32 %v192, %v193
    %v195 = vsub.f32 1.0, %v194
    %v196 = vmul.f32 %v193, %v195
    %v197 = vadd.f32 %v193, %v196
    %vm198 = vweird.f32 %v192
    %vm199 = vweird.f32 %v193
    %vm200 = vmor %vm198, %vm199
    %v201 = vsel %vm200, %v193, %v197
    %v202 = vand.u32 2147483647, %v192
    %vm203 = vcmp.eq.f32.partialorder %v202, 8.507059e+37
    %v204 = vand.u32 %v192, 2147483648
    %v205 = vor.u32 1.1754944e-38, %v204
    %v206 = vsel %vm203, %v205, %v201
    %v207 = vmul.f32 1.0, %v206
    %v208 = vtanh.pop %v188
    %v209 = vmul.f32 %v207, 0.0
    %211 = vrot.lane.b32.xlu0 %v208, 64
    %v212 = vpop.permute.xlu0 %211
    %v214 = vmul.f32 %v207, %v212
    %216 = vrot.lane.b32.xlu0 %v214, 32
    %v217 = vpop.permute.xlu0 %216
    %v219 = vadd.f32 %v209, %v217
    %v220 = vtanh.pop %v219
    %222 = vrot.lane.b32.xlu0 %v220, 64
    %v223 = vpop.permute.xlu0 %222
    %v225 = vmul.f32 %v207, %v223
    %v226 = vpack.c.bf16 %v225, %v225
    %228 = vrot.lane.b32.xlu0 %v226, 32
    %v229 = vpop.permute.xlu0 %228
    %v231 = vsel %vm171, %v229, 0
    %233 = vmatpush.bf16.msra.mxu0 0
    %234 = vmatpush.bf16.msra.mxu0 0
    %235 = vmatpush.bf16.msra.mxu0 0
    %236 = vmatpush.bf16.msra.mxu0 0
    %237 = vmatpush.bf16.msra.mxu0 0
    %238 = vmatpush.bf16.msra.mxu0 0
    %239 = vmatpush.bf16.msra.mxu0 %v168
    %240 = vmatpush.bf16.msra.mxu0 %v167
    %241 = vmatmul.bf16.gmra.mxu0 %v231
    %v242 = vpop.f32.mrf.mxu0
    %v243 = vadd.f32 0.0, %v242
    %v244 = vpop.f32.mrf.mxu0
    %245 = vdwg.mxu0
    %v247 = vrot.slane %v243, 6
    %v249 = vadd.f32 %v151, %v247
    %v250 = vxor.u32 %v249, 2147483648
    %v251 = vmul.f32 %v250, 1.442695
    %v252 = vpow.pop %v251
    %v253 = vadd.f32 %v252, 1.0
    %v254 = vrcp.pop %v253
    %v255 = vmul.f32 %v253, %v254
    %v256 = vsub.f32 1.0, %v255
    %v257 = vmul.f32 %v254, %v256
    %v258 = vadd.f32 %v254, %v257
    %vm259 = vweird.f32 %v253
    %vm260 = vweird.f32 %v254
    %vm261 = vmor %vm259, %vm260
    %v262 = vsel %vm261, %v254, %v258
    %v263 = vand.u32 2147483647, %v253
    %vm264 = vcmp.eq.f32.partialorder %v263, 8.507059e+37
    %v265 = vand.u32 %v253, 2147483648
    %v266 = vor.u32 1.1754944e-38, %v265
    %v267 = vsel %vm264, %v266, %v262
    %v268 = vmul.f32 1.0, %v267
    %v269 = vtanh.pop %v249
    %v271 = vrot.slane %v219, 6
    %v273 = vmul.f32 %v268, %v271
    %275 = vrot.lane.b32.xlu0 %v269, 64
    %v276 = vpop.permute.xlu0 %275
    %v278 = vmul.f32 %v268, %v276
    %280 = vrot.lane.b32.xlu0 %v278, 32
    %v281 = vpop.permute.xlu0 %280
    %v283 = vadd.f32 %v273, %v281
    %v284 = vtanh.pop %v283
    %286 = vrot.lane.b32.xlu0 %v284, 64
    %v287 = vpop.permute.xlu0 %286
    %v289 = vmul.f32 %v268, %v287
    %v290 = vpack.c.bf16 %v289, %v289
    %v292 = vrot.slane %v290, 1
    %293 = vrot.lane.b32.xlu0 %v292, 32
    %v294 = vpop.permute.xlu0 %293
    %v296 = vsel %vm171, %v294, 0
    %298 = vmatpush.bf16.msra.mxu0 0
    %299 = vmatpush.bf16.msra.mxu0 0
    %300 = vmatpush.bf16.msra.mxu0 0
    %301 = vmatpush.bf16.msra.mxu0 0
    %302 = vmatpush.bf16.msra.mxu0 0
    %303 = vmatpush.bf16.msra.mxu0 0
    %304 = vmatpush.bf16.msra.mxu0 %v168
    %305 = vmatpush.bf16.msra.mxu0 %v167
    %306 = vmatmul.bf16.gmra.mxu0 %v296
    %v307 = vpop.f32.mrf.mxu0
    %v308 = vadd.f32 0.0, %v307
    %v309 = vpop.f32.mrf.mxu0
    %310 = vdwg.mxu0
    %v312 = vrot.slane %v308, 4
    %v314 = vadd.f32 %v151, %v312
    %v315 = vxor.u32 %v314, 2147483648
    %v316 = vmul.f32 %v315, 1.442695
    %v317 = vpow.pop %v316
    %v318 = vadd.f32 %v317, 1.0
    %v319 = vrcp.pop %v318
    %v320 = vmul.f32 %v318, %v319
    %v321 = vsub.f32 1.0, %v320
    %v322 = vmul.f32 %v319, %v321
    %v323 = vadd.f32 %v319, %v322
    %vm324 = vweird.f32 %v318
    %vm325 = vweird.f32 %v319
    %vm326 = vmor %vm324, %vm325
    %v327 = vsel %vm326, %v319, %v323
    %v328 = vand.u32 2147483647, %v318
    %vm329 = vcmp.eq.f32.partialorder %v328, 8.507059e+37
    %v330 = vand.u32 %v318, 2147483648
    %v331 = vor.u32 1.1754944e-38, %v330
    %v332 = vsel %vm329, %v331, %v327
    %v333 = vmul.f32 1.0, %v332
    %v334 = vtanh.pop %v314
    %v336 = vrot.slane %v283, 6
    %v338 = vmul.f32 %v333, %v336
    %340 = vrot.lane.b32.xlu0 %v334, 64
    %v341 = vpop.permute.xlu0 %340
    %v343 = vmul.f32 %v333, %v341
    %345 = vrot.lane.b32.xlu0 %v343, 32
    %v346 = vpop.permute.xlu0 %345
    %v348 = vadd.f32 %v338, %v346
    %v349 = vtanh.pop %v348
    %351 = vrot.lane.b32.xlu0 %v349, 64
    %v352 = vpop.permute.xlu0 %351
    %v354 = vmul.f32 %v333, %v352
    %v355 = vpack.c.bf16 %v354, %v354
    %v357 = vrot.slane %v355, 2
    %358 = vrot.lane.b32.xlu0 %v357, 32
    %v359 = vpop.permute.xlu0 %358
    %v361 = vsel %vm171, %v359, 0
    %363 = vmatpush.bf16.msra.mxu0 0
    %364 = vmatpush.bf16.msra.mxu0 0
    %365 = vmatpush.bf16.msra.mxu0 0
    %366 = vmatpush.bf16.msra.mxu0 0
    %367 = vmatpush.bf16.msra.mxu0 0
    %368 = vmatpush.bf16.msra.mxu0 0
    %369 = vmatpush.bf16.msra.mxu0 %v168
    %370 = vmatpush.bf16.msra.mxu0 %v167
    %371 = vmatmul.bf16.gmra.mxu0 %v361
    %v372 = vpop.f32.mrf.mxu0
    %v373 = vadd.f32 0.0, %v372
    %v374 = vpop.f32.mrf.mxu0
    %375 = vdwg.mxu0
    %v377 = vrot.slane %v373, 2
    %v379 = vadd.f32 %v151, %v377
    %v380 = vxor.u32 %v379, 2147483648
    %v381 = vmul.f32 %v380, 1.442695
    %v382 = vpow.pop %v381
    %v383 = vadd.f32 %v382, 1.0
    %v384 = vrcp.pop %v383
    %v385 = vmul.f32 %v383, %v384
    %v386 = vsub.f32 1.0, %v385
    %v387 = vmul.f32 %v384, %v386
    %v388 = vadd.f32 %v384, %v387
    %vm389 = vweird.f32 %v383
    %vm390 = vweird.f32 %v384
    %vm391 = vmor %vm389, %vm390
    %v392 = vsel %vm391, %v384, %v388
    %v393 = vand.u32 2147483647, %v383
    %vm394 = vcmp.eq.f32.partialorder %v393, 8.507059e+37
    %v395 = vand.u32 %v383, 2147483648
    %v396 = vor.u32 1.1754944e-38, %v395
    %v397 = vsel %vm394, %v396, %v392
    %v398 = vmul.f32 1.0, %v397
    %v399 = vtanh.pop %v379
    %v401 = vrot.slane %v348, 6
    %v403 = vmul.f32 %v398, %v401
    %405 = vrot.lane.b32.xlu0 %v399, 64
    %v406 = vpop.permute.xlu0 %405
    %v408 = vmul.f32 %v398, %v406
    %410 = vrot.lane.b32.xlu0 %v408, 32
    %v411 = vpop.permute.xlu0 %410
    %v413 = vadd.f32 %v403, %v411
    %v414 = vtanh.pop %v413
    %416 = vrot.lane.b32.xlu0 %v414, 64
    %v417 = vpop.permute.xlu0 %416
    %v419 = vmul.f32 %v398, %v417
    %v420 = vpack.c.bf16 %v419, %v419
    %v422 = vrot.slane %v420, 3
    %423 = vrot.lane.b32.xlu0 %v422, 32
    %v424 = vpop.permute.xlu0 %423
    %v426 = vsel %vm171, %v424, 0
    %428 = vmatpush.bf16.msra.mxu0 0
    %429 = vmatpush.bf16.msra.mxu0 0
    %430 = vmatpush.bf16.msra.mxu0 0
    %431 = vmatpush.bf16.msra.mxu0 0
    %432 = vmatpush.bf16.msra.mxu0 0
    %433 = vmatpush.bf16.msra.mxu0 0
    %434 = vmatpush.bf16.msra.mxu0 %v168
    %435 = vmatpush.bf16.msra.mxu0 %v167
    %436 = vmatmul.bf16.gmra.mxu0 %v426
    %v437 = vpop.f32.mrf.mxu0
    %v438 = vadd.f32 0.0, %v437
    %v439 = vpop.f32.mrf.mxu0
    %440 = vdwg.mxu0
    %v441 = vadd.f32 %v153, %v438
    %v442 = vxor.u32 %v441, 2147483648
    %v443 = vmul.f32 %v442, 1.442695
    %v444 = vpow.pop %v443
    %v445 = vadd.f32 %v444, 1.0
    %v446 = vrcp.pop %v445
    %v447 = vmul.f32 %v445, %v446
    %v448 = vsub.f32 1.0, %v447
    %v449 = vmul.f32 %v446, %v448
    %v450 = vadd.f32 %v446, %v449
    %vm451 = vweird.f32 %v445
    %vm452 = vweird.f32 %v446
    %vm453 = vmor %vm451, %vm452
    %v454 = vsel %vm453, %v446, %v450
    %v455 = vand.u32 2147483647, %v445
    %vm456 = vcmp.eq.f32.partialorder %v455, 8.507059e+37
    %v457 = vand.u32 %v445, 2147483648
    %v458 = vor.u32 1.1754944e-38, %v457
    %v459 = vsel %vm456, %v458, %v454
    %v460 = vmul.f32 1.0, %v459
    %v461 = vtanh.pop %v441
    %v463 = vrot.slane %v413, 6
    %v465 = vmul.f32 %v460, %v463
    %467 = vrot.lane.b32.xlu0 %v461, 64
    %v468 = vpop.permute.xlu0 %467
    %v470 = vmul.f32 %v460, %v468
    %472 = vrot.lane.b32.xlu0 %v470, 32
    %v473 = vpop.permute.xlu0 %472
    %v475 = vadd.f32 %v465, %v473
    %v476 = vtanh.pop %v475
    %478 = vrot.lane.b32.xlu0 %v476, 64
    %v479 = vpop.permute.xlu0 %478
    %v481 = vmul.f32 %v460, %v479
    %v482 = vpack.c.bf16 %v481, %v481
    %484 = vrot.lane.b32.xlu0 %v482, 32
    %v485 = vpop.permute.xlu0 %484
    %v487 = vsel %vm171, %v485, 0
    %489 = vmatpush.bf16.msra.mxu0 0
    %490 = vmatpush.bf16.msra.mxu0 0
    %491 = vmatpush.bf16.msra.mxu0 0
    %492 = vmatpush.bf16.msra.mxu0 0
    %493 = vmatpush.bf16.msra.mxu0 0
    %494 = vmatpush.bf16.msra.mxu0 0
    %495 = vmatpush.bf16.msra.mxu0 %v168
    %496 = vmatpush.bf16.msra.mxu0 %v167
    %497 = vmatmul.bf16.gmra.mxu0 %v487
    %v498 = vpop.f32.mrf.mxu0
    %v499 = vadd.f32 0.0, %v498
    %v500 = vpop.f32.mrf.mxu0
    %501 = vdwg.mxu0
    %v503 = vrot.slane %v499, 6
    %v505 = vadd.f32 %v153, %v503
    %v506 = vxor.u32 %v505, 2147483648
    %v507 = vmul.f32 %v506, 1.442695
    %v508 = vpow.pop %v507
    %v509 = vadd.f32 %v508, 1.0
    %v510 = vrcp.pop %v509
    %v511 = vmul.f32 %v509, %v510
    %v512 = vsub.f32 1.0, %v511
    %v513 = vmul.f32 %v510, %v512
    %v514 = vadd.f32 %v510, %v513
    %vm515 = vweird.f32 %v509
    %vm516 = vweird.f32 %v510
    %vm517 = vmor %vm515, %vm516
    %v518 = vsel %vm517, %v510, %v514
    %v519 = vand.u32 2147483647, %v509
    %vm520 = vcmp.eq.f32.partialorder %v519, 8.507059e+37
    %v521 = vand.u32 %v509, 2147483648
    %v522 = vor.u32 1.1754944e-38, %v521
    %v523 = vsel %vm520, %v522, %v518
    %v524 = vmul.f32 1.0, %v523
    %v525 = vtanh.pop %v505
    %v527 = vrot.slane %v475, 6
    %v529 = vmul.f32 %v524, %v527
    %531 = vrot.lane.b32.xlu0 %v525, 64
    %v532 = vpop.permute.xlu0 %531
    %v534 = vmul.f32 %v524, %v532
    %536 = vrot.lane.b32.xlu0 %v534, 32
    %v537 = vpop.permute.xlu0 %536
    %v539 = vadd.f32 %v529, %v537
    %v540 = vtanh.pop %v539
    %542 = vrot.lane.b32.xlu0 %v540, 64
    %v543 = vpop.permute.xlu0 %542
    %v545 = vmul.f32 %v524, %v543
    %v546 = vpack.c.bf16 %v545, %v545
    %v548 = vrot.slane %v546, 1
    %549 = vrot.lane.b32.xlu0 %v548, 32
    %v550 = vpop.permute.xlu0 %549
    %v552 = vsel %vm171, %v550, 0
    %554 = vmatpush.bf16.msra.mxu0 0
    %555 = vmatpush.bf16.msra.mxu0 0
    %556 = vmatpush.bf16.msra.mxu0 0
    %557 = vmatpush.bf16.msra.mxu0 0
    %558 = vmatpush.bf16.msra.mxu0 0
    %559 = vmatpush.bf16.msra.mxu0 0
    %560 = vmatpush.bf16.msra.mxu0 %v168
    %561 = vmatpush.bf16.msra.mxu0 %v167
    %562 = vmatmul.bf16.gmra.mxu0 %v552
    %v563 = vpop.f32.mrf.mxu0
    %v564 = vadd.f32 0.0, %v563
    %v565 = vpop.f32.mrf.mxu0
    %566 = vdwg.mxu0
    %v568 = vrot.slane %v564, 4
    %v570 = vadd.f32 %v153, %v568
    %v571 = vxor.u32 %v570, 2147483648
    %v572 = vmul.f32 %v571, 1.442695
    %v573 = vpow.pop %v572
    %v574 = vadd.f32 %v573, 1.0
    %v575 = vrcp.pop %v574
    %v576 = vmul.f32 %v574, %v575
    %v577 = vsub.f32 1.0, %v576
    %v578 = vmul.f32 %v575, %v577
    %v579 = vadd.f32 %v575, %v578
    %vm580 = vweird.f32 %v574
    %vm581 = vweird.f32 %v575
    %vm582 = vmor %vm580, %vm581
    %v583 = vsel %vm582, %v575, %v579
    %v584 = vand.u32 2147483647, %v574
    %vm585 = vcmp.eq.f32.partialorder %v584, 8.507059e+37
    %v586 = vand.u32 %v574, 2147483648
    %v587 = vor.u32 1.1754944e-38, %v586
    %v588 = vsel %vm585, %v587, %v583
    %v589 = vmul.f32 1.0, %v588
    %v590 = vtanh.pop %v570
    %v592 = vrot.slane %v539, 6
    %v594 = vmul.f32 %v589, %v592
    %596 = vrot.lane.b32.xlu0 %v590, 64
    %v597 = vpop.permute.xlu0 %596
    %v599 = vmul.f32 %v589, %v597
    %601 = vrot.lane.b32.xlu0 %v599, 32
    %v602 = vpop.permute.xlu0 %601
    %v604 = vadd.f32 %v594, %v602
    %v605 = vtanh.pop %v604
    %607 = vrot.lane.b32.xlu0 %v605, 64
    %v608 = vpop.permute.xlu0 %607
    %v610 = vmul.f32 %v589, %v608
    %v611 = vpack.c.bf16 %v610, %v610
    %v613 = vrot.slane %v611, 2
    %614 = vrot.lane.b32.xlu0 %v613, 32
    %v615 = vpop.permute.xlu0 %614
    %v617 = vsel %vm171, %v615, 0
    %619 = vmatpush.bf16.msra.mxu0 0
    %620 = vmatpush.bf16.msra.mxu0 0
    %621 = vmatpush.bf16.msra.mxu0 0
    %622 = vmatpush.bf16.msra.mxu0 0
    %623 = vmatpush.bf16.msra.mxu0 0
    %624 = vmatpush.bf16.msra.mxu0 0
    %625 = vmatpush.bf16.msra.mxu0 %v168
    %626 = vmatpush.bf16.msra.mxu0 %v167
    %627 = vmatmul.bf16.gmra.mxu0 %v617
    %v628 = vpop.f32.mrf.mxu0
    %v629 = vadd.f32 0.0, %v628
    %v630 = vpop.f32.mrf.mxu0
    %631 = vdwg.mxu0
    %v633 = vrot.slane %v629, 2
    %v635 = vadd.f32 %v153, %v633
    %v636 = vxor.u32 %v635, 2147483648
    %v637 = vmul.f32 %v636, 1.442695
    %v638 = vpow.pop %v637
    %v639 = vadd.f32 %v638, 1.0
    %v640 = vrcp.pop %v639
    %v641 = vmul.f32 %v639, %v640
    %v642 = vsub.f32 1.0, %v641
    %v643 = vmul.f32 %v640, %v642
    %v644 = vadd.f32 %v640, %v643
    %vm645 = vweird.f32 %v639
    %vm646 = vweird.f32 %v640
    %vm647 = vmor %vm645, %vm646
    %v648 = vsel %vm647, %v640, %v644
    %v649 = vand.u32 2147483647, %v639
    %vm650 = vcmp.eq.f32.partialorder %v649, 8.507059e+37
    %v651 = vand.u32 %v639, 2147483648
    %v652 = vor.u32 1.1754944e-38, %v651
    %v653 = vsel %vm650, %v652, %v648
    %v654 = vmul.f32 1.0, %v653
    %v655 = vtanh.pop %v635
    %v657 = vrot.slane %v604, 6
    %v659 = vmul.f32 %v654, %v657
    %661 = vrot.lane.b32.xlu0 %v655, 64
    %v662 = vpop.permute.xlu0 %661
    %v664 = vmul.f32 %v654, %v662
    %666 = vrot.lane.b32.xlu0 %v664, 32
    %v667 = vpop.permute.xlu0 %666
    %v669 = vadd.f32 %v659, %v667
    %v670 = vtanh.pop %v669
    %672 = vrot.lane.b32.xlu0 %v670, 64
    %v673 = vpop.permute.xlu0 %672
    %v675 = vmul.f32 %v654, %v673
    %v676 = vld [vmem:[%s2] sm:$0xf]
    %v677 = vld [vmem:[%s2 + $0x4] sm:$0xf]
    %v678 = vld [vmem:[%s2 + $0x8] sm:$0xf]
    %v679 = vld [vmem:[%s2 + $0xc] sm:$0xf]
    %s680 = scalar_lea.vmem [#allocation5], 16
    %v681 = vld [vmem:[%s680] sm:$0xf]
    %v682 = vld [vmem:[%s680 + $0x4] sm:$0xf]
    %v683 = vld [vmem:[%s680 + $0x8] sm:$0xf]
    %v684 = vld [vmem:[%s680 + $0xc] sm:$0xf]
    %v685 = vld [vmem:[%s4] sm:$0x1]
    %v687 = vperm.slane %v685, 0
    %v693 = vunpack.c.l.b16 %v676
    %v694 = vunpack.c.l.b16 %v677
    %v695 = vunpack.c.l.b16 %v678
    %v696 = vunpack.c.l.b16 %v679
    %v697 = vpack.c.b16 %v694, %v693
    %v698 = vpack.c.b16 %v696, %v695
    %701 = vmatpush.bf16.msra.mxu0 0
    %702 = vmatpush.bf16.msra.mxu0 0
    %703 = vmatpush.bf16.msra.mxu0 0
    %704 = vmatpush.bf16.msra.mxu0 0
    %705 = vmatpush.bf16.msra.mxu0 0
    %706 = vmatpush.bf16.msra.mxu0 0
    %707 = vmatpush.bf16.msra.mxu0 %v698
    %708 = vmatpush.bf16.msra.mxu0 %v697
    %709 = vmatmul.bf16.gmra.mxu0 %v231
    %v710 = vpop.f32.mrf.mxu0
    %v711 = vadd.f32 %v687, %v710
    %v712 = vpop.f32.mrf.mxu0
    %713 = vdwg.mxu0
    %v718 = vunpack.c.l.b16 %v681
    %v719 = vunpack.c.l.b16 %v682
    %v720 = vunpack.c.l.b16 %v683
    %v721 = vunpack.c.l.b16 %v684
    %v722 = vpack.c.b16 %v719, %v718
    %v723 = vpack.c.b16 %v721, %v720
    %726 = vmatpush.bf16.msra.mxu0 0
    %727 = vmatpush.bf16.msra.mxu0 0
    %728 = vmatpush.bf16.msra.mxu0 0
    %729 = vmatpush.bf16.msra.mxu0 0
    %730 = vmatpush.bf16.msra.mxu0 0
    %731 = vmatpush.bf16.msra.mxu0 0
    %732 = vmatpush.bf16.msra.mxu0 %v723
    %733 = vmatpush.bf16.msra.mxu0 %v722
    %734 = vmatmul.bf16.gmra.mxu0 %v173
    %v735 = vpop.f32.mrf.mxu0
    %v736 = vadd.f32 0.0, %v735
    %v737 = vpop.f32.mrf.mxu0
    %738 = vdwg.mxu0
    %v739 = vadd.f32 %v711, %v736
    %v740 = vxor.u32 %v739, 2147483648
    %v741 = vmul.f32 %v740, 1.442695
    %v742 = vpow.pop %v741
    %v743 = vadd.f32 %v742, 1.0
    %v744 = vrcp.pop %v743
    %v745 = vmul.f32 %v743, %v744
    %v746 = vsub.f32 1.0, %v745
    %v747 = vmul.f32 %v744, %v746
    %v748 = vadd.f32 %v744, %v747
    %vm749 = vweird.f32 %v743
    %vm750 = vweird.f32 %v744
    %vm751 = vmor %vm749, %vm750
    %v752 = vsel %vm751, %v744, %v748
    %v753 = vand.u32 2147483647, %v743
    %vm754 = vcmp.eq.f32.partialorder %v753, 8.507059e+37
    %v755 = vand.u32 %v743, 2147483648
    %v756 = vor.u32 1.1754944e-38, %v755
    %v757 = vsel %vm754, %v756, %v752
    %v758 = vmul.f32 1.0, %v757
    %v759 = vtanh.pop %v739
    %v760 = vmul.f32 %v758, 0.0
    %762 = vrot.lane.b32.xlu0 %v759, 64
    %v763 = vpop.permute.xlu0 %762
    %v765 = vmul.f32 %v758, %v763
    %767 = vrot.lane.b32.xlu0 %v765, 32
    %v768 = vpop.permute.xlu0 %767
    %v770 = vadd.f32 %v760, %v768
    %v771 = vtanh.pop %v770
    %773 = vrot.lane.b32.xlu0 %v771, 64
    %v774 = vpop.permute.xlu0 %773
    %v776 = vmul.f32 %v758, %v774
    %777 = vmatpush.bf16.msra.mxu0 0
    %778 = vmatpush.bf16.msra.mxu0 0
    %779 = vmatpush.bf16.msra.mxu0 0
    %780 = vmatpush.bf16.msra.mxu0 0
    %781 = vmatpush.bf16.msra.mxu0 0
    %782 = vmatpush.bf16.msra.mxu0 0
    %783 = vmatpush.bf16.msra.mxu0 %v698
    %784 = vmatpush.bf16.msra.mxu0 %v697
    %785 = vmatmul.bf16.gmra.mxu0 %v296
    %v786 = vpop.f32.mrf.mxu0
    %v787 = vadd.f32 %v687, %v786
    %v788 = vpop.f32.mrf.mxu0
    %789 = vdwg.mxu0
    %v790 = vpack.c.bf16 %v776, %v776
    %792 = vrot.lane.b32.xlu0 %v790, 32
    %v793 = vpop.permute.xlu0 %792
    %v795 = vsel %vm171, %v793, 0
    %797 = vmatpush.bf16.msra.mxu0 0
    %798 = vmatpush.bf16.msra.mxu0 0
    %799 = vmatpush.bf16.msra.mxu0 0
    %800 = vmatpush.bf16.msra.mxu0 0
    %801 = vmatpush.bf16.msra.mxu0 0
    %802 = vmatpush.bf16.msra.mxu0 0
    %803 = vmatpush.bf16.msra.mxu0 %v723
    %804 = vmatpush.bf16.msra.mxu0 %v722
    %805 = vmatmul.bf16.gmra.mxu0 %v795
    %v806 = vpop.f32.mrf.mxu0
    %v807 = vadd.f32 0.0, %v806
    %v808 = vpop.f32.mrf.mxu0
    %809 = vdwg.mxu0
    %v810 = vadd.f32 %v787, %v807
    %v811 = vxor.u32 %v810, 2147483648
    %v812 = vmul.f32 %v811, 1.442695
    %v813 = vpow.pop %v812
    %v814 = vadd.f32 %v813, 1.0
    %v815 = vrcp.pop %v814
    %v816 = vmul.f32 %v814, %v815
    %v817 = vsub.f32 1.0, %v816
    %v818 = vmul.f32 %v815, %v817
    %v819 = vadd.f32 %v815, %v818
    %vm820 = vweird.f32 %v814
    %vm821 = vweird.f32 %v815
    %vm822 = vmor %vm820, %vm821
    %v823 = vsel %vm822, %v815, %v819
    %v824 = vand.u32 2147483647, %v814
    %vm825 = vcmp.eq.f32.partialorder %v824, 8.507059e+37
    %v826 = vand.u32 %v814, 2147483648
    %v827 = vor.u32 1.1754944e-38, %v826
    %v828 = vsel %vm825, %v827, %v823
    %v829 = vmul.f32 1.0, %v828
    %v830 = vtanh.pop %v810
    %v831 = vmul.f32 %v829, %v770
    %833 = vrot.lane.b32.xlu0 %v830, 64
    %v834 = vpop.permute.xlu0 %833
    %v836 = vmul.f32 %v829, %v834
    %838 = vrot.lane.b32.xlu0 %v836, 32
    %v839 = vpop.permute.xlu0 %838
    %v841 = vadd.f32 %v831, %v839
    %v842 = vtanh.pop %v841
    %844 = vrot.lane.b32.xlu0 %v842, 64
    %v845 = vpop.permute.xlu0 %844
    %v847 = vmul.f32 %v829, %v845
    %848 = vmatpush.bf16.msra.mxu0 0
    %849 = vmatpush.bf16.msra.mxu0 0
    %850 = vmatpush.bf16.msra.mxu0 0
    %851 = vmatpush.bf16.msra.mxu0 0
    %852 = vmatpush.bf16.msra.mxu0 0
    %853 = vmatpush.bf16.msra.mxu0 0
    %854 = vmatpush.bf16.msra.mxu0 %v698
    %855 = vmatpush.bf16.msra.mxu0 %v697
    %856 = vmatmul.bf16.gmra.mxu0 %v361
    %v857 = vpop.f32.mrf.mxu0
    %v858 = vadd.f32 %v687, %v857
    %v859 = vpop.f32.mrf.mxu0
    %860 = vdwg.mxu0
    %v861 = vpack.c.bf16 %v847, %v847
    %863 = vrot.lane.b32.xlu0 %v861, 32
    %v864 = vpop.permute.xlu0 %863
    %v866 = vsel %vm171, %v864, 0
    %868 = vmatpush.bf16.msra.mxu0 0
    %869 = vmatpush.bf16.msra.mxu0 0
    %870 = vmatpush.bf16.msra.mxu0 0
    %871 = vmatpush.bf16.msra.mxu0 0
    %872 = vmatpush.bf16.msra.mxu0 0
    %873 = vmatpush.bf16.msra.mxu0 0
    %874 = vmatpush.bf16.msra.mxu0 %v723
    %875 = vmatpush.bf16.msra.mxu0 %v722
    %876 = vmatmul.bf16.gmra.mxu0 %v866
    %v877 = vpop.f32.mrf.mxu0
    %v878 = vadd.f32 0.0, %v877
    %v879 = vpop.f32.mrf.mxu0
    %880 = vdwg.mxu0
    %v881 = vadd.f32 %v858, %v878
    %v882 = vxor.u32 %v881, 2147483648
    %v883 = vmul.f32 %v882, 1.442695
    %v884 = vpow.pop %v883
    %v885 = vadd.f32 %v884, 1.0
    %v886 = vrcp.pop %v885
    %v887 = vmul.f32 %v885, %v886
    %v888 = vsub.f32 1.0, %v887
    %v889 = vmul.f32 %v886, %v888
    %v890 = vadd.f32 %v886, %v889
    %vm891 = vweird.f32 %v885
    %vm892 = vweird.f32 %v886
    %vm893 = vmor %vm891, %vm892
    %v894 = vsel %vm893, %v886, %v890
    %v895 = vand.u32 2147483647, %v885
    %vm896 = vcmp.eq.f32.partialorder %v895, 8.507059e+37
    %v897 = vand.u32 %v885, 2147483648
    %v898 = vor.u32 1.1754944e-38, %v897
    %v899 = vsel %vm896, %v898, %v894
    %v900 = vmul.f32 1.0, %v899
    %v901 = vtanh.pop %v881
    %v902 = vmul.f32 %v900, %v841
    %904 = vrot.lane.b32.xlu0 %v901, 64
    %v905 = vpop.permute.xlu0 %904
    %v907 = vmul.f32 %v900, %v905
    %909 = vrot.lane.b32.xlu0 %v907, 32
    %v910 = vpop.permute.xlu0 %909
    %v912 = vadd.f32 %v902, %v910
    %v913 = vtanh.pop %v912
    %915 = vrot.lane.b32.xlu0 %v913, 64
    %v916 = vpop.permute.xlu0 %915
    %v918 = vmul.f32 %v900, %v916
    %919 = vmatpush.bf16.msra.mxu0 0
    %920 = vmatpush.bf16.msra.mxu0 0
    %921 = vmatpush.bf16.msra.mxu0 0
    %922 = vmatpush.bf16.msra.mxu0 0
    %923 = vmatpush.bf16.msra.mxu0 0
    %924 = vmatpush.bf16.msra.mxu0 0
    %925 = vmatpush.bf16.msra.mxu0 %v698
    %926 = vmatpush.bf16.msra.mxu0 %v697
    %927 = vmatmul.bf16.gmra.mxu0 %v426
    %v928 = vpop.f32.mrf.mxu0
    %v929 = vadd.f32 %v687, %v928
    %v930 = vpop.f32.mrf.mxu0
    %931 = vdwg.mxu0
    %v932 = vpack.c.bf16 %v918, %v918
    %934 = vrot.lane.b32.xlu0 %v932, 32
    %v935 = vpop.permute.xlu0 %934
    %v937 = vsel %vm171, %v935, 0
    %939 = vmatpush.bf16.msra.mxu0 0
    %940 = vmatpush.bf16.msra.mxu0 0
    %941 = vmatpush.bf16.msra.mxu0 0
    %942 = vmatpush.bf16.msra.mxu0 0
    %943 = vmatpush.bf16.msra.mxu0 0
    %944 = vmatpush.bf16.msra.mxu0 0
    %945 = vmatpush.bf16.msra.mxu0 %v723
    %946 = vmatpush.bf16.msra.mxu0 %v722
    %947 = vmatmul.bf16.gmra.mxu0 %v937
    %v948 = vpop.f32.mrf.mxu0
    %v949 = vadd.f32 0.0, %v948
    %v950 = vpop.f32.mrf.mxu0
    %951 = vdwg.mxu0
    %v952 = vadd.f32 %v929, %v949
    %v953 = vxor.u32 %v952, 2147483648
    %v954 = vmul.f32 %v953, 1.442695
    %v955 = vpow.pop %v954
    %v956 = vadd.f32 %v955, 1.0
    %v957 = vrcp.pop %v956
    %v958 = vmul.f32 %v956, %v957
    %v959 = vsub.f32 1.0, %v958
    %v960 = vmul.f32 %v957, %v959
    %v961 = vadd.f32 %v957, %v960
    %vm962 = vweird.f32 %v956
    %vm963 = vweird.f32 %v957
    %vm964 = vmor %vm962, %vm963
    %v965 = vsel %vm964, %v957, %v961
    %v966 = vand.u32 2147483647, %v956
    %vm967 = vcmp.eq.f32.partialorder %v966, 8.507059e+37
    %v968 = vand.u32 %v956, 2147483648
    %v969 = vor.u32 1.1754944e-38, %v968
    %v970 = vsel %vm967, %v969, %v965
    %v971 = vmul.f32 1.0, %v970
    %v972 = vtanh.pop %v952
    %v973 = vmul.f32 %v971, %v912
    %975 = vrot.lane.b32.xlu0 %v972, 64
    %v976 = vpop.permute.xlu0 %975
    %v978 = vmul.f32 %v971, %v976
    %980 = vrot.lane.b32.xlu0 %v978, 32
    %v981 = vpop.permute.xlu0 %980
    %v983 = vadd.f32 %v973, %v981
    %v984 = vtanh.pop %v983
    %986 = vrot.lane.b32.xlu0 %v984, 64
    %v987 = vpop.permute.xlu0 %986
    %v989 = vmul.f32 %v971, %v987
    %990 = vmatpush.bf16.msra.mxu0 0
    %991 = vmatpush.bf16.msra.mxu0 0
    %992 = vmatpush.bf16.msra.mxu0 0
    %993 = vmatpush.bf16.msra.mxu0 0
    %994 = vmatpush.bf16.msra.mxu0 0
    %995 = vmatpush.bf16.msra.mxu0 0
    %996 = vmatpush.bf16.msra.mxu0 %v698
    %997 = vmatpush.bf16.msra.mxu0 %v697
    %998 = vmatmul.bf16.gmra.mxu0 %v487
    %v999 = vpop.f32.mrf.mxu0
    %v1000 = vadd.f32 %v687, %v999
    %v1001 = vpop.f32.mrf.mxu0
    %1002 = vdwg.mxu0
    %v1003 = vpack.c.bf16 %v989, %v989
    %1005 = vrot.lane.b32.xlu0 %v1003, 32
    %v1006 = vpop.permute.xlu0 %1005
    %v1008 = vsel %vm171, %v1006, 0
    %1010 = vmatpush.bf16.msra.mxu0 0
    %1011 = vmatpush.bf16.msra.mxu0 0
    %1012 = vmatpush.bf16.msra.mxu0 0
    %1013 = vmatpush.bf16.msra.mxu0 0
    %1014 = vmatpush.bf16.msra.mxu0 0
    %1015 = vmatpush.bf16.msra.mxu0 0
    %1016 = vmatpush.bf16.msra.mxu0 %v723
    %1017 = vmatpush.bf16.msra.mxu0 %v722
    %1018 = vmatmul.bf16.gmra.mxu0 %v1008
    %v1019 = vpop.f32.mrf.mxu0
    %v1020 = vadd.f32 0.0, %v1019
    %v1021 = vpop.f32.mrf.mxu0
    %1022 = vdwg.mxu0
    %v1023 = vadd.f32 %v1000, %v1020
    %v1024 = vxor.u32 %v1023, 2147483648
    %v1025 = vmul.f32 %v1024, 1.442695
    %v1026 = vpow.pop %v1025
    %v1027 = vadd.f32 %v1026, 1.0
    %v1028 = vrcp.pop %v1027
    %v1029 = vmul.f32 %v1027, %v1028
    %v1030 = vsub.f32 1.0, %v1029
    %v1031 = vmul.f32 %v1028, %v1030
    %v1032 = vadd.f32 %v1028, %v1031
    %vm1033 = vweird.f32 %v1027
    %vm1034 = vweird.f32 %v1028
    %vm1035 = vmor %vm1033, %vm1034
    %v1036 = vsel %vm1035, %v1028, %v1032
    %v1037 = vand.u32 2147483647, %v1027
    %vm1038 = vcmp.eq.f32.partialorder %v1037, 8.507059e+37
    %v1039 = vand.u32 %v1027, 2147483648
    %v1040 = vor.u32 1.1754944e-38, %v1039
    %v1041 = vsel %vm1038, %v1040, %v1036
    %v1042 = vmul.f32 1.0, %v1041
    %v1043 = vtanh.pop %v1023
    %v1044 = vmul.f32 %v1042, %v983
    %1046 = vrot.lane.b32.xlu0 %v1043, 64
    %v1047 = vpop.permute.xlu0 %1046
    %v1049 = vmul.f32 %v1042, %v1047
    %1051 = vrot.lane.b32.xlu0 %v1049, 32
    %v1052 = vpop.permute.xlu0 %1051
    %v1054 = vadd.f32 %v1044, %v1052
    %v1055 = vtanh.pop %v1054
    %1057 = vrot.lane.b32.xlu0 %v1055, 64
    %v1058 = vpop.permute.xlu0 %1057
    %v1060 = vmul.f32 %v1042, %v1058
    %1061 = vmatpush.bf16.msra.mxu0 0
    %1062 = vmatpush.bf16.msra.mxu0 0
    %1063 = vmatpush.bf16.msra.mxu0 0
    %1064 = vmatpush.bf16.msra.mxu0 0
    %1065 = vmatpush.bf16.msra.mxu0 0
    %1066 = vmatpush.bf16.msra.mxu0 0
    %1067 = vmatpush.bf16.msra.mxu0 %v698
    %1068 = vmatpush.bf16.msra.mxu0 %v697
    %1069 = vmatmul.bf16.gmra.mxu0 %v552
    %v1070 = vpop.f32.mrf.mxu0
    %v1071 = vadd.f32 %v687, %v1070
    %v1072 = vpop.f32.mrf.mxu0
    %1073 = vdwg.mxu0
    %v1074 = vpack.c.bf16 %v1060, %v1060
    %1076 = vrot.lane.b32.xlu0 %v1074, 32
    %v1077 = vpop.permute.xlu0 %1076
    %v1079 = vsel %vm171, %v1077, 0
    %1081 = vmatpush.bf16.msra.mxu0 0
    %1082 = vmatpush.bf16.msra.mxu0 0
    %1083 = vmatpush.bf16.msra.mxu0 0
    %1084 = vmatpush.bf16.msra.mxu0 0
    %1085 = vmatpush.bf16.msra.mxu0 0
    %1086 = vmatpush.bf16.msra.mxu0 0
    %1087 = vmatpush.bf16.msra.mxu0 %v723
    %1088 = vmatpush.bf16.msra.mxu0 %v722
    %1089 = vmatmul.bf16.gmra.mxu0 %v1079
    %v1090 = vpop.f32.mrf.mxu0
    %v1091 = vadd.f32 0.0, %v1090
    %v1092 = vpop.f32.mrf.mxu0
    %1093 = vdwg.mxu0
    %v1094 = vadd.f32 %v1071, %v1091
    %v1095 = vxor.u32 %v1094, 2147483648
    %v1096 = vmul.f32 %v1095, 1.442695
    %v1097 = vpow.pop %v1096
    %v1098 = vadd.f32 %v1097, 1.0
    %v1099 = vrcp.pop %v1098
    %v1100 = vmul.f32 %v1098, %v1099
    %v1101 = vsub.f32 1.0, %v1100
    %v1102 = vmul.f32 %v1099, %v1101
    %v1103 = vadd.f32 %v1099, %v1102
    %vm1104 = vweird.f32 %v1098
    %vm1105 = vweird.f32 %v1099
    %vm1106 = vmor %vm1104, %vm1105
    %v1107 = vsel %vm1106, %v1099, %v1103
    %v1108 = vand.u32 2147483647, %v1098
    %vm1109 = vcmp.eq.f32.partialorder %v1108, 8.507059e+37
    %v1110 = vand.u32 %v1098, 2147483648
    %v1111 = vor.u32 1.1754944e-38, %v1110
    %v1112 = vsel %vm1109, %v1111, %v1107
    %v1113 = vmul.f32 1.0, %v1112
    %v1114 = vtanh.pop %v1094
    %v1115 = vmul.f32 %v1113, %v1054
    %1117 = vrot.lane.b32.xlu0 %v1114, 64
    %v1118 = vpop.permute.xlu0 %1117
    %v1120 = vmul.f32 %v1113, %v1118
    %1122 = vrot.lane.b32.xlu0 %v1120, 32
    %v1123 = vpop.permute.xlu0 %1122
    %v1125 = vadd.f32 %v1115, %v1123
    %v1126 = vtanh.pop %v1125
    %1128 = vrot.lane.b32.xlu0 %v1126, 64
    %v1129 = vpop.permute.xlu0 %1128
    %v1131 = vmul.f32 %v1113, %v1129
    %1132 = vmatpush.bf16.msra.mxu0 0
    %1133 = vmatpush.bf16.msra.mxu0 0
    %1134 = vmatpush.bf16.msra.mxu0 0
    %1135 = vmatpush.bf16.msra.mxu0 0
    %1136 = vmatpush.bf16.msra.mxu0 0
    %1137 = vmatpush.bf16.msra.mxu0 0
    %1138 = vmatpush.bf16.msra.mxu0 %v698
    %1139 = vmatpush.bf16.msra.mxu0 %v697
    %1140 = vmatmul.bf16.gmra.mxu0 %v617
    %v1141 = vpop.f32.mrf.mxu0
    %v1142 = vadd.f32 %v687, %v1141
    %v1143 = vpop.f32.mrf.mxu0
    %1144 = vdwg.mxu0
    %v1145 = vpack.c.bf16 %v1131, %v1131
    %1147 = vrot.lane.b32.xlu0 %v1145, 32
    %v1148 = vpop.permute.xlu0 %1147
    %v1150 = vsel %vm171, %v1148, 0
    %1152 = vmatpush.bf16.msra.mxu0 0
    %1153 = vmatpush.bf16.msra.mxu0 0
    %1154 = vmatpush.bf16.msra.mxu0 0
    %1155 = vmatpush.bf16.msra.mxu0 0
    %1156 = vmatpush.bf16.msra.mxu0 0
    %1157 = vmatpush.bf16.msra.mxu0 0
    %1158 = vmatpush.bf16.msra.mxu0 %v723
    %1159 = vmatpush.bf16.msra.mxu0 %v722
    %1160 = vmatmul.bf16.gmra.mxu0 %v1150
    %v1161 = vpop.f32.mrf.mxu0
    %v1162 = vadd.f32 0.0, %v1161
    %v1163 = vpop.f32.mrf.mxu0
    %1164 = vdwg.mxu0
    %v1165 = vadd.f32 %v1142, %v1162
    %v1166 = vxor.u32 %v1165, 2147483648
    %v1167 = vmul.f32 %v1166, 1.442695
    %v1168 = vpow.pop %v1167
    %v1169 = vadd.f32 %v1168, 1.0
    %v1170 = vrcp.pop %v1169
    %v1171 = vmul.f32 %v1169, %v1170
    %v1172 = vsub.f32 1.0, %v1171
    %v1173 = vmul.f32 %v1170, %v1172
    %v1174 = vadd.f32 %v1170, %v1173
    %vm1175 = vweird.f32 %v1169
    %vm1176 = vweird.f32 %v1170
    %vm1177 = vmor %vm1175, %vm1176
    %v1178 = vsel %vm1177, %v1170, %v1174
    %v1179 = vand.u32 2147483647, %v1169
    %vm1180 = vcmp.eq.f32.partialorder %v1179, 8.507059e+37
    %v1181 = vand.u32 %v1169, 2147483648
    %v1182 = vor.u32 1.1754944e-38, %v1181
    %v1183 = vsel %vm1180, %v1182, %v1178
    %v1184 = vmul.f32 1.0, %v1183
    %v1185 = vtanh.pop %v1165
    %v1186 = vmul.f32 %v1184, %v1125
    %1188 = vrot.lane.b32.xlu0 %v1185, 64
    %v1189 = vpop.permute.xlu0 %1188
    %v1191 = vmul.f32 %v1184, %v1189
    %1193 = vrot.lane.b32.xlu0 %v1191, 32
    %v1194 = vpop.permute.xlu0 %1193
    %v1196 = vadd.f32 %v1186, %v1194
    %v1197 = vtanh.pop %v1196
    %1199 = vrot.lane.b32.xlu0 %v1197, 64
    %v1200 = vpop.permute.xlu0 %1199
    %v1202 = vmul.f32 %v1184, %v1200
    %v1203 = vpack.c.bf16 %v675, %v675
    %v1205 = vrot.slane %v1203, 3
    %1206 = vrot.lane.b32.xlu0 %v1205, 32
    %v1207 = vpop.permute.xlu0 %1206
    %v1209 = vsel %vm171, %v1207, 0
    %1211 = vmatpush.bf16.msra.mxu0 0
    %1212 = vmatpush.bf16.msra.mxu0 0
    %1213 = vmatpush.bf16.msra.mxu0 0
    %1214 = vmatpush.bf16.msra.mxu0 0
    %1215 = vmatpush.bf16.msra.mxu0 0
    %1216 = vmatpush.bf16.msra.mxu0 0
    %1217 = vmatpush.bf16.msra.mxu0 %v698
    %1218 = vmatpush.bf16.msra.mxu0 %v697
    %1219 = vmatmul.bf16.gmra.mxu0 %v1209
    %v1220 = vpop.f32.mrf.mxu0
    %v1221 = vadd.f32 %v687, %v1220
    %v1222 = vpop.f32.mrf.mxu0
    %1223 = vdwg.mxu0
    %v1224 = vpack.c.bf16 %v1202, %v1202
    %1226 = vrot.lane.b32.xlu0 %v1224, 32
    %v1227 = vpop.permute.xlu0 %1226
    %v1229 = vsel %vm171, %v1227, 0
    %1231 = vmatpush.bf16.msra.mxu0 0
    %1232 = vmatpush.bf16.msra.mxu0 0
    %1233 = vmatpush.bf16.msra.mxu0 0
    %1234 = vmatpush.bf16.msra.mxu0 0
    %1235 = vmatpush.bf16.msra.mxu0 0
    %1236 = vmatpush.bf16.msra.mxu0 0
    %1237 = vmatpush.bf16.msra.mxu0 %v723
    %1238 = vmatpush.bf16.msra.mxu0 %v722
    %1239 = vmatmul.bf16.gmra.mxu0 %v1229
    %v1240 = vpop.f32.mrf.mxu0
    %v1241 = vadd.f32 0.0, %v1240
    %v1242 = vpop.f32.mrf.mxu0
    %1243 = vdwg.mxu0
    %v1244 = vadd.f32 %v1221, %v1241
    %v1245 = vxor.u32 %v1244, 2147483648
    %v1246 = vmul.f32 %v1245, 1.442695
    %v1247 = vpow.pop %v1246
    %v1248 = vadd.f32 %v1247, 1.0
    %v1249 = vrcp.pop %v1248
    %v1250 = vmul.f32 %v1248, %v1249
    %v1251 = vsub.f32 1.0, %v1250
    %v1252 = vmul.f32 %v1249, %v1251
    %v1253 = vadd.f32 %v1249, %v1252
    %vm1254 = vweird.f32 %v1248
    %vm1255 = vweird.f32 %v1249
    %vm1256 = vmor %vm1254, %vm1255
    %v1257 = vsel %vm1256, %v1249, %v1253
    %v1258 = vand.u32 2147483647, %v1248
    %vm1259 = vcmp.eq.f32.partialorder %v1258, 8.507059e+37
    %v1260 = vand.u32 %v1248, 2147483648
    %v1261 = vor.u32 1.1754944e-38, %v1260
    %v1262 = vsel %vm1259, %v1261, %v1257
    %v1263 = vmul.f32 1.0, %v1262
    %v1264 = vtanh.pop %v1244
    %v1265 = vmul.f32 %v1263, %v1196
    %1267 = vrot.lane.b32.xlu0 %v1264, 64
    %v1268 = vpop.permute.xlu0 %1267
    %v1270 = vmul.f32 %v1263, %v1268
    %1272 = vrot.lane.b32.xlu0 %v1270, 32
    %v1273 = vpop.permute.xlu0 %1272
    %v1275 = vadd.f32 %v1265, %v1273
    %v1276 = vtanh.pop %v1275
    %1278 = vrot.lane.b32.xlu0 %v1276, 64
    %v1279 = vpop.permute.xlu0 %1278
    %v1281 = vmul.f32 %v1263, %v1279
    %s1282 = scalar_lea.vmem %s2, 16
    %v1283 = vld [vmem:[%s1282] sm:$0xf]
    %v1284 = vld [vmem:[%s1282 + $0x4] sm:$0xf]
    %v1285 = vld [vmem:[%s1282 + $0x8] sm:$0xf]
    %v1286 = vld [vmem:[%s1282 + $0xc] sm:$0xf]
    %s1287 = scalar_lea.vmem [#allocation5], 32
    %v1288 = vld [vmem:[%s1287] sm:$0xf]
    %v1289 = vld [vmem:[%s1287 + $0x4] sm:$0xf]
    %v1290 = vld [vmem:[%s1287 + $0x8] sm:$0xf]
    %v1291 = vld [vmem:[%s1287 + $0xc] sm:$0xf]
    %s1292 = scalar_lea.vmem %s4, 1
    %v1293 = vld [vmem:[%s1292] sm:$0x1]
    %v1295 = vperm.slane %v1293, 0
    %v1301 = vunpack.c.l.b16 %v1283
    %v1302 = vunpack.c.l.b16 %v1284
    %v1303 = vunpack.c.l.b16 %v1285
    %v1304 = vunpack.c.l.b16 %v1286
    %v1305 = vpack.c.b16 %v1302, %v1301
    %v1306 = vpack.c.b16 %v1304, %v1303
    %1309 = vmatpush.bf16.msra.mxu0 0
    %1310 = vmatpush.bf16.msra.mxu0 0
    %1311 = vmatpush.bf16.msra.mxu0 0
    %1312 = vmatpush.bf16.msra.mxu0 0
    %1313 = vmatpush.bf16.msra.mxu0 0
    %1314 = vmatpush.bf16.msra.mxu0 0
    %1315 = vmatpush.bf16.msra.mxu0 %v1306
    %1316 = vmatpush.bf16.msra.mxu0 %v1305
    %1317 = vmatmul.bf16.gmra.mxu0 %v795
    %v1318 = vpop.f32.mrf.mxu0
    %v1319 = vadd.f32 %v1295, %v1318
    %v1320 = vpop.f32.mrf.mxu0
    %1321 = vdwg.mxu0
    %v1326 = vunpack.c.l.b16 %v1288
    %v1327 = vunpack.c.l.b16 %v1289
    %v1328 = vunpack.c.l.b16 %v1290
    %v1329 = vunpack.c.l.b16 %v1291
    %v1330 = vpack.c.b16 %v1327, %v1326
    %v1331 = vpack.c.b16 %v1329, %v1328
    %1334 = vmatpush.bf16.msra.mxu0 0
    %1335 = vmatpush.bf16.msra.mxu0 0
    %1336 = vmatpush.bf16.msra.mxu0 0
    %1337 = vmatpush.bf16.msra.mxu0 0
    %1338 = vmatpush.bf16.msra.mxu0 0
    %1339 = vmatpush.bf16.msra.mxu0 0
    %1340 = vmatpush.bf16.msra.mxu0 %v1331
    %1341 = vmatpush.bf16.msra.mxu0 %v1330
    %1342 = vmatmul.bf16.gmra.mxu0 %v173
    %v1343 = vpop.f32.mrf.mxu0
    %v1344 = vadd.f32 0.0, %v1343
    %v1345 = vpop.f32.mrf.mxu0
    %1346 = vdwg.mxu0
    %v1347 = vadd.f32 %v1319, %v1344
    %v1348 = vxor.u32 %v1347, 2147483648
    %v1349 = vmul.f32 %v1348, 1.442695
    %v1350 = vpow.pop %v1349
    %v1351 = vadd.f32 %v1350, 1.0
    %v1352 = vrcp.pop %v1351
    %v1353 = vmul.f32 %v1351, %v1352
    %v1354 = vsub.f32 1.0, %v1353
    %v1355 = vmul.f32 %v1352, %v1354
    %v1356 = vadd.f32 %v1352, %v1355
    %vm1357 = vweird.f32 %v1351
    %vm1358 = vweird.f32 %v1352
    %vm1359 = vmor %vm1357, %vm1358
    %v1360 = vsel %vm1359, %v1352, %v1356
    %v1361 = vand.u32 2147483647, %v1351
    %vm1362 = vcmp.eq.f32.partialorder %v1361, 8.507059e+37
    %v1363 = vand.u32 %v1351, 2147483648
    %v1364 = vor.u32 1.1754944e-38, %v1363
    %v1365 = vsel %vm1362, %v1364, %v1360
    %v1366 = vmul.f32 1.0, %v1365
    %v1367 = vtanh.pop %v1347
    %v1368 = vmul.f32 %v1366, 0.0
    %1370 = vrot.lane.b32.xlu0 %v1367, 64
    %v1371 = vpop.permute.xlu0 %1370
    %v1373 = vmul.f32 %v1366, %v1371
    %1375 = vrot.lane.b32.xlu0 %v1373, 32
    %v1376 = vpop.permute.xlu0 %1375
    %v1378 = vadd.f32 %v1368, %v1376
    %v1379 = vtanh.pop %v1378
    %1381 = vrot.lane.b32.xlu0 %v1379, 64
    %v1382 = vpop.permute.xlu0 %1381
    %v1384 = vmul.f32 %v1366, %v1382
    %1385 = vmatpush.bf16.msra.mxu0 0
    %1386 = vmatpush.bf16.msra.mxu0 0
    %1387 = vmatpush.bf16.msra.mxu0 0
    %1388 = vmatpush.bf16.msra.mxu0 0
    %1389 = vmatpush.bf16.msra.mxu0 0
    %1390 = vmatpush.bf16.msra.mxu0 0
    %1391 = vmatpush.bf16.msra.mxu0 %v1306
    %1392 = vmatpush.bf16.msra.mxu0 %v1305
    %1393 = vmatmul.bf16.gmra.mxu0 %v866
    %v1394 = vpop.f32.mrf.mxu0
    %v1395 = vadd.f32 %v1295, %v1394
    %v1396 = vpop.f32.mrf.mxu0
    %1397 = vdwg.mxu0
    %v1398 = vpack.c.bf16 %v1384, %v1384
    %1400 = vrot.lane.b32.xlu0 %v1398, 32
    %v1401 = vpop.permute.xlu0 %1400
    %v1403 = vsel %vm171, %v1401, 0
    %1405 = vmatpush.bf16.msra.mxu0 0
    %1406 = vmatpush.bf16.msra.mxu0 0
    %1407 = vmatpush.bf16.msra.mxu0 0
    %1408 = vmatpush.bf16.msra.mxu0 0
    %1409 = vmatpush.bf16.msra.mxu0 0
    %1410 = vmatpush.bf16.msra.mxu0 0
    %1411 = vmatpush.bf16.msra.mxu0 %v1331
    %1412 = vmatpush.bf16.msra.mxu0 %v1330
    %1413 = vmatmul.bf16.gmra.mxu0 %v1403
    %v1414 = vpop.f32.mrf.mxu0
    %v1415 = vadd.f32 0.0, %v1414
    %v1416 = vpop.f32.mrf.mxu0
    %1417 = vdwg.mxu0
    %v1418 = vadd.f32 %v1395, %v1415
    %v1419 = vxor.u32 %v1418, 2147483648
    %v1420 = vmul.f32 %v1419, 1.442695
    %v1421 = vpow.pop %v1420
    %v1422 = vadd.f32 %v1421, 1.0
    %v1423 = vrcp.pop %v1422
    %v1424 = vmul.f32 %v1422, %v1423
    %v1425 = vsub.f32 1.0, %v1424
    %v1426 = vmul.f32 %v1423, %v1425
    %v1427 = vadd.f32 %v1423, %v1426
    %vm1428 = vweird.f32 %v1422
    %vm1429 = vweird.f32 %v1423
    %vm1430 = vmor %vm1428, %vm1429
    %v1431 = vsel %vm1430, %v1423, %v1427
    %v1432 = vand.u32 2147483647, %v1422
    %vm1433 = vcmp.eq.f32.partialorder %v1432, 8.507059e+37
    %v1434 = vand.u32 %v1422, 2147483648
    %v1435 = vor.u32 1.1754944e-38, %v1434
    %v1436 = vsel %vm1433, %v1435, %v1431
    %v1437 = vmul.f32 1.0, %v1436
    %v1438 = vtanh.pop %v1418
    %v1439 = vmul.f32 %v1437, %v1378
    %1441 = vrot.lane.b32.xlu0 %v1438, 64
    %v1442 = vpop.permute.xlu0 %1441
    %v1444 = vmul.f32 %v1437, %v1442
    %1446 = vrot.lane.b32.xlu0 %v1444, 32
    %v1447 = vpop.permute.xlu0 %1446
    %v1449 = vadd.f32 %v1439, %v1447
    %v1450 = vtanh.pop %v1449
    %1452 = vrot.lane.b32.xlu0 %v1450, 64
    %v1453 = vpop.permute.xlu0 %1452
    %v1455 = vmul.f32 %v1437, %v1453
    %1456 = vmatpush.bf16.msra.mxu0 0
    %1457 = vmatpush.bf16.msra.mxu0 0
    %1458 = vmatpush.bf16.msra.mxu0 0
    %1459 = vmatpush.bf16.msra.mxu0 0
    %1460 = vmatpush.bf16.msra.mxu0 0
    %1461 = vmatpush.bf16.msra.mxu0 0
    %1462 = vmatpush.bf16.msra.mxu0 %v1306
    %1463 = vmatpush.bf16.msra.mxu0 %v1305
    %1464 = vmatmul.bf16.gmra.mxu0 %v937
    %v1465 = vpop.f32.mrf.mxu0
    %v1466 = vadd.f32 %v1295, %v1465
    %v1467 = vpop.f32.mrf.mxu0
    %1468 = vdwg.mxu0
    %v1469 = vpack.c.bf16 %v1455, %v1455
    %1471 = vrot.lane.b32.xlu0 %v1469, 32
    %v1472 = vpop.permute.xlu0 %1471
    %v1474 = vsel %vm171, %v1472, 0
    %1476 = vmatpush.bf16.msra.mxu0 0
    %1477 = vmatpush.bf16.msra.mxu0 0
    %1478 = vmatpush.bf16.msra.mxu0 0
    %1479 = vmatpush.bf16.msra.mxu0 0
    %1480 = vmatpush.bf16.msra.mxu0 0
    %1481 = vmatpush.bf16.msra.mxu0 0
    %1482 = vmatpush.bf16.msra.mxu0 %v1331
    %1483 = vmatpush.bf16.msra.mxu0 %v1330
    %1484 = vmatmul.bf16.gmra.mxu0 %v1474
    %v1485 = vpop.f32.mrf.mxu0
    %v1486 = vadd.f32 0.0, %v1485
    %v1487 = vpop.f32.mrf.mxu0
    %1488 = vdwg.mxu0
    %v1489 = vadd.f32 %v1466, %v1486
    %v1490 = vxor.u32 %v1489, 2147483648
    %v1491 = vmul.f32 %v1490, 1.442695
    %v1492 = vpow.pop %v1491
    %v1493 = vadd.f32 %v1492, 1.0
    %v1494 = vrcp.pop %v1493
    %v1495 = vmul.f32 %v1493, %v1494
    %v1496 = vsub.f32 1.0, %v1495
    %v1497 = vmul.f32 %v1494, %v1496
    %v1498 = vadd.f32 %v1494, %v1497
    %vm1499 = vweird.f32 %v1493
    %vm1500 = vweird.f32 %v1494
    %vm1501 = vmor %vm1499, %vm1500
    %v1502 = vsel %vm1501, %v1494, %v1498
    %v1503 = vand.u32 2147483647, %v1493
    %vm1504 = vcmp.eq.f32.partialorder %v1503, 8.507059e+37
    %v1505 = vand.u32 %v1493, 2147483648
    %v1506 = vor.u32 1.1754944e-38, %v1505
    %v1507 = vsel %vm1504, %v1506, %v1502
    %v1508 = vmul.f32 1.0, %v1507
    %v1509 = vtanh.pop %v1489
    %v1510 = vmul.f32 %v1508, %v1449
    %1512 = vrot.lane.b32.xlu0 %v1509, 64
    %v1513 = vpop.permute.xlu0 %1512
    %v1515 = vmul.f32 %v1508, %v1513
    %1517 = vrot.lane.b32.xlu0 %v1515, 32
    %v1518 = vpop.permute.xlu0 %1517
    %v1520 = vadd.f32 %v1510, %v1518
    %v1521 = vtanh.pop %v1520
    %1523 = vrot.lane.b32.xlu0 %v1521, 64
    %v1524 = vpop.permute.xlu0 %1523
    %v1526 = vmul.f32 %v1508, %v1524
    %1527 = vmatpush.bf16.msra.mxu0 0
    %1528 = vmatpush.bf16.msra.mxu0 0
    %1529 = vmatpush.bf16.msra.mxu0 0
    %1530 = vmatpush.bf16.msra.mxu0 0
    %1531 = vmatpush.bf16.msra.mxu0 0
    %1532 = vmatpush.bf16.msra.mxu0 0
    %1533 = vmatpush.bf16.msra.mxu0 %v1306
    %1534 = vmatpush.bf16.msra.mxu0 %v1305
    %1535 = vmatmul.bf16.gmra.mxu0 %v1008
    %v1536 = vpop.f32.mrf.mxu0
    %v1537 = vadd.f32 %v1295, %v1536
    %v1538 = vpop.f32.mrf.mxu0
    %1539 = vdwg.mxu0
    %v1540 = vpack.c.bf16 %v1526, %v1526
    %1542 = vrot.lane.b32.xlu0 %v1540, 32
    %v1543 = vpop.permute.xlu0 %1542
    %v1545 = vsel %vm171, %v1543, 0
    %1547 = vmatpush.bf16.msra.mxu0 0
    %1548 = vmatpush.bf16.msra.mxu0 0
    %1549 = vmatpush.bf16.msra.mxu0 0
    %1550 = vmatpush.bf16.msra.mxu0 0
    %1551 = vmatpush.bf16.msra.mxu0 0
    %1552 = vmatpush.bf16.msra.mxu0 0
    %1553 = vmatpush.bf16.msra.mxu0 %v1331
    %1554 = vmatpush.bf16.msra.mxu0 %v1330
    %1555 = vmatmul.bf16.gmra.mxu0 %v1545
    %v1556 = vpop.f32.mrf.mxu0
    %v1557 = vadd.f32 0.0, %v1556
    %v1558 = vpop.f32.mrf.mxu0
    %1559 = vdwg.mxu0
    %v1560 = vadd.f32 %v1537, %v1557
    %v1561 = vxor.u32 %v1560, 2147483648
    %v1562 = vmul.f32 %v1561, 1.442695
    %v1563 = vpow.pop %v1562
    %v1564 = vadd.f32 %v1563, 1.0
    %v1565 = vrcp.pop %v1564
    %v1566 = vmul.f32 %v1564, %v1565
    %v1567 = vsub.f32 1.0, %v1566
    %v1568 = vmul.f32 %v1565, %v1567
    %v1569 = vadd.f32 %v1565, %v1568
    %vm1570 = vweird.f32 %v1564
    %vm1571 = vweird.f32 %v1565
    %vm1572 = vmor %vm1570, %vm1571
    %v1573 = vsel %vm1572, %v1565, %v1569
    %v1574 = vand.u32 2147483647, %v1564
    %vm1575 = vcmp.eq.f32.partialorder %v1574, 8.507059e+37
    %v1576 = vand.u32 %v1564, 2147483648
    %v1577 = vor.u32 1.1754944e-38, %v1576
    %v1578 = vsel %vm1575, %v1577, %v1573
    %v1579 = vmul.f32 1.0, %v1578
    %v1580 = vtanh.pop %v1560
    %v1581 = vmul.f32 %v1579, %v1520
    %1583 = vrot.lane.b32.xlu0 %v1580, 64
    %v1584 = vpop.permute.xlu0 %1583
    %v1586 = vmul.f32 %v1579, %v1584
    %1588 = vrot.lane.b32.xlu0 %v1586, 32
    %v1589 = vpop.permute.xlu0 %1588
    %v1591 = vadd.f32 %v1581, %v1589
    %v1592 = vtanh.pop %v1591
    %1594 = vrot.lane.b32.xlu0 %v1592, 64
    %v1595 = vpop.permute.xlu0 %1594
    %v1597 = vmul.f32 %v1579, %v1595
    %1598 = vmatpush.bf16.msra.mxu0 0
    %1599 = vmatpush.bf16.msra.mxu0 0
    %1600 = vmatpush.bf16.msra.mxu0 0
    %1601 = vmatpush.bf16.msra.mxu0 0
    %1602 = vmatpush.bf16.msra.mxu0 0
    %1603 = vmatpush.bf16.msra.mxu0 0
    %1604 = vmatpush.bf16.msra.mxu0 %v1306
    %1605 = vmatpush.bf16.msra.mxu0 %v1305
    %1606 = vmatmul.bf16.gmra.mxu0 %v1079
    %v1607 = vpop.f32.mrf.mxu0
    %v1608 = vadd.f32 %v1295, %v1607
    %v1609 = vpop.f32.mrf.mxu0
    %1610 = vdwg.mxu0
    %v1611 = vpack.c.bf16 %v1597, %v1597
    %1613 = vrot.lane.b32.xlu0 %v1611, 32
    %v1614 = vpop.permute.xlu0 %1613
    %v1616 = vsel %vm171, %v1614, 0
    %1618 = vmatpush.bf16.msra.mxu0 0
    %1619 = vmatpush.bf16.msra.mxu0 0
    %1620 = vmatpush.bf16.msra.mxu0 0
    %1621 = vmatpush.bf16.msra.mxu0 0
    %1622 = vmatpush.bf16.msra.mxu0 0
    %1623 = vmatpush.bf16.msra.mxu0 0
    %1624 = vmatpush.bf16.msra.mxu0 %v1331
    %1625 = vmatpush.bf16.msra.mxu0 %v1330
    %1626 = vmatmul.bf16.gmra.mxu0 %v1616
    %v1627 = vpop.f32.mrf.mxu0
    %v1628 = vadd.f32 0.0, %v1627
    %v1629 = vpop.f32.mrf.mxu0
    %1630 = vdwg.mxu0
    %v1631 = vadd.f32 %v1608, %v1628
    %v1632 = vxor.u32 %v1631, 2147483648
    %v1633 = vmul.f32 %v1632, 1.442695
    %v1634 = vpow.pop %v1633
    %v1635 = vadd.f32 %v1634, 1.0
    %v1636 = vrcp.pop %v1635
    %v1637 = vmul.f32 %v1635, %v1636
    %v1638 = vsub.f32 1.0, %v1637
    %v1639 = vmul.f32 %v1636, %v1638
    %v1640 = vadd.f32 %v1636, %v1639
    %vm1641 = vweird.f32 %v1635
    %vm1642 = vweird.f32 %v1636
    %vm1643 = vmor %vm1641, %vm1642
    %v1644 = vsel %vm1643, %v1636, %v1640
    %v1645 = vand.u32 2147483647, %v1635
    %vm1646 = vcmp.eq.f32.partialorder %v1645, 8.507059e+37
    %v1647 = vand.u32 %v1635, 2147483648
    %v1648 = vor.u32 1.1754944e-38, %v1647
    %v1649 = vsel %vm1646, %v1648, %v1644
    %v1650 = vmul.f32 1.0, %v1649
    %v1651 = vtanh.pop %v1631
    %v1652 = vmul.f32 %v1650, %v1591
    %1654 = vrot.lane.b32.xlu0 %v1651, 64
    %v1655 = vpop.permute.xlu0 %1654
    %v1657 = vmul.f32 %v1650, %v1655
    %1659 = vrot.lane.b32.xlu0 %v1657, 32
    %v1660 = vpop.permute.xlu0 %1659
    %v1662 = vadd.f32 %v1652, %v1660
    %v1663 = vtanh.pop %v1662
    %1665 = vrot.lane.b32.xlu0 %v1663, 64
    %v1666 = vpop.permute.xlu0 %1665
    %v1668 = vmul.f32 %v1650, %v1666
    %1669 = vmatpush.bf16.msra.mxu0 0
    %1670 = vmatpush.bf16.msra.mxu0 0
    %1671 = vmatpush.bf16.msra.mxu0 0
    %1672 = vmatpush.bf16.msra.mxu0 0
    %1673 = vmatpush.bf16.msra.mxu0 0
    %1674 = vmatpush.bf16.msra.mxu0 0
    %1675 = vmatpush.bf16.msra.mxu0 %v1306
    %1676 = vmatpush.bf16.msra.mxu0 %v1305
    %1677 = vmatmul.bf16.gmra.mxu0 %v1150
    %v1678 = vpop.f32.mrf.mxu0
    %v1679 = vadd.f32 %v1295, %v1678
    %v1680 = vpop.f32.mrf.mxu0
    %1681 = vdwg.mxu0
    %v1682 = vpack.c.bf16 %v1668, %v1668
    %1684 = vrot.lane.b32.xlu0 %v1682, 32
    %v1685 = vpop.permute.xlu0 %1684
    %v1687 = vsel %vm171, %v1685, 0
    %1689 = vmatpush.bf16.msra.mxu0 0
    %1690 = vmatpush.bf16.msra.mxu0 0
    %1691 = vmatpush.bf16.msra.mxu0 0
    %1692 = vmatpush.bf16.msra.mxu0 0
    %1693 = vmatpush.bf16.msra.mxu0 0
    %1694 = vmatpush.bf16.msra.mxu0 0
    %1695 = vmatpush.bf16.msra.mxu0 %v1331
    %1696 = vmatpush.bf16.msra.mxu0 %v1330
    %1697 = vmatmul.bf16.gmra.mxu0 %v1687
    %v1698 = vpop.f32.mrf.mxu0
    %v1699 = vadd.f32 0.0, %v1698
    %v1700 = vpop.f32.mrf.mxu0
    %1701 = vdwg.mxu0
    %v1702 = vadd.f32 %v1679, %v1699
    %v1703 = vxor.u32 %v1702, 2147483648
    %v1704 = vmul.f32 %v1703, 1.442695
    %v1705 = vpow.pop %v1704
    %v1706 = vadd.f32 %v1705, 1.0
    %v1707 = vrcp.pop %v1706
    %v1708 = vmul.f32 %v1706, %v1707
    %v1709 = vsub.f32 1.0, %v1708
    %v1710 = vmul.f32 %v1707, %v1709
    %v1711 = vadd.f32 %v1707, %v1710
    %vm1712 = vweird.f32 %v1706
    %vm1713 = vweird.f32 %v1707
    %vm1714 = vmor %vm1712, %vm1713
    %v1715 = vsel %vm1714, %v1707, %v1711
    %v1716 = vand.u32 2147483647, %v1706
    %vm1717 = vcmp.eq.f32.partialorder %v1716, 8.507059e+37
    %v1718 = vand.u32 %v1706, 2147483648
    %v1719 = vor.u32 1.1754944e-38, %v1718
    %v1720 = vsel %vm1717, %v1719, %v1715
    %v1721 = vmul.f32 1.0, %v1720
    %v1722 = vtanh.pop %v1702
    %v1723 = vmul.f32 %v1721, %v1662
    %1725 = vrot.lane.b32.xlu0 %v1722, 64
    %v1726 = vpop.permute.xlu0 %1725
    %v1728 = vmul.f32 %v1721, %v1726
    %1730 = vrot.lane.b32.xlu0 %v1728, 32
    %v1731 = vpop.permute.xlu0 %1730
    %v1733 = vadd.f32 %v1723, %v1731
    %v1734 = vtanh.pop %v1733
    %1736 = vrot.lane.b32.xlu0 %v1734, 64
    %v1737 = vpop.permute.xlu0 %1736
    %v1739 = vmul.f32 %v1721, %v1737
    %1740 = vmatpush.bf16.msra.mxu0 0
    %1741 = vmatpush.bf16.msra.mxu0 0
    %1742 = vmatpush.bf16.msra.mxu0 0
    %1743 = vmatpush.bf16.msra.mxu0 0
    %1744 = vmatpush.bf16.msra.mxu0 0
    %1745 = vmatpush.bf16.msra.mxu0 0
    %1746 = vmatpush.bf16.msra.mxu0 %v1306
    %1747 = vmatpush.bf16.msra.mxu0 %v1305
    %1748 = vmatmul.bf16.gmra.mxu0 %v1229
    %v1749 = vpop.f32.mrf.mxu0
    %v1750 = vadd.f32 %v1295, %v1749
    %v1751 = vpop.f32.mrf.mxu0
    %1752 = vdwg.mxu0
    %v1753 = vpack.c.bf16 %v1739, %v1739
    %1755 = vrot.lane.b32.xlu0 %v1753, 32
    %v1756 = vpop.permute.xlu0 %1755
    %v1758 = vsel %vm171, %v1756, 0
    %1760 = vmatpush.bf16.msra.mxu0 0
    %1761 = vmatpush.bf16.msra.mxu0 0
    %1762 = vmatpush.bf16.msra.mxu0 0
    %1763 = vmatpush.bf16.msra.mxu0 0
    %1764 = vmatpush.bf16.msra.mxu0 0
    %1765 = vmatpush.bf16.msra.mxu0 0
    %1766 = vmatpush.bf16.msra.mxu0 %v1331
    %1767 = vmatpush.bf16.msra.mxu0 %v1330
    %1768 = vmatmul.bf16.gmra.mxu0 %v1758
    %v1769 = vpop.f32.mrf.mxu0
    %v1770 = vadd.f32 0.0, %v1769
    %v1771 = vpop.f32.mrf.mxu0
    %1772 = vdwg.mxu0
    %v1773 = vadd.f32 %v1750, %v1770
    %v1774 = vxor.u32 %v1773, 2147483648
    %v1775 = vmul.f32 %v1774, 1.442695
    %v1776 = vpow.pop %v1775
    %v1777 = vadd.f32 %v1776, 1.0
    %v1778 = vrcp.pop %v1777
    %v1779 = vmul.f32 %v1777, %v1778
    %v1780 = vsub.f32 1.0, %v1779
    %v1781 = vmul.f32 %v1778, %v1780
    %v1782 = vadd.f32 %v1778, %v1781
    %vm1783 = vweird.f32 %v1777
    %vm1784 = vweird.f32 %v1778
    %vm1785 = vmor %vm1783, %vm1784
    %v1786 = vsel %vm1785, %v1778, %v1782
    %v1787 = vand.u32 2147483647, %v1777
    %vm1788 = vcmp.eq.f32.partialorder %v1787, 8.507059e+37
    %v1789 = vand.u32 %v1777, 2147483648
    %v1790 = vor.u32 1.1754944e-38, %v1789
    %v1791 = vsel %vm1788, %v1790, %v1786
    %v1792 = vmul.f32 1.0, %v1791
    %v1793 = vtanh.pop %v1773
    %v1794 = vmul.f32 %v1792, %v1733
    %1796 = vrot.lane.b32.xlu0 %v1793, 64
    %v1797 = vpop.permute.xlu0 %1796
    %v1799 = vmul.f32 %v1792, %v1797
    %1801 = vrot.lane.b32.xlu0 %v1799, 32
    %v1802 = vpop.permute.xlu0 %1801
    %v1804 = vadd.f32 %v1794, %v1802
    %v1805 = vtanh.pop %v1804
    %1807 = vrot.lane.b32.xlu0 %v1805, 64
    %v1808 = vpop.permute.xlu0 %1807
    %v1810 = vmul.f32 %v1792, %v1808
    %v1811 = vpack.c.bf16 %v1281, %v1281
    %1813 = vrot.lane.b32.xlu0 %v1811, 32
    %v1814 = vpop.permute.xlu0 %1813
    %v1816 = vsel %vm171, %v1814, 0
    %1818 = vmatpush.bf16.msra.mxu0 0
    %1819 = vmatpush.bf16.msra.mxu0 0
    %1820 = vmatpush.bf16.msra.mxu0 0
    %1821 = vmatpush.bf16.msra.mxu0 0
    %1822 = vmatpush.bf16.msra.mxu0 0
    %1823 = vmatpush.bf16.msra.mxu0 0
    %1824 = vmatpush.bf16.msra.mxu0 %v1306
    %1825 = vmatpush.bf16.msra.mxu0 %v1305
    %1826 = vmatmul.bf16.gmra.mxu0 %v1816
    %v1827 = vpop.f32.mrf.mxu0
    %v1828 = vadd.f32 %v1295, %v1827
    %v1829 = vpop.f32.mrf.mxu0
    %1830 = vdwg.mxu0
    %v1831 = vpack.c.bf16 %v1810, %v1810
    %1833 = vrot.lane.b32.xlu0 %v1831, 32
    %v1834 = vpop.permute.xlu0 %1833
    %v1836 = vsel %vm171, %v1834, 0
    %1838 = vmatpush.bf16.msra.mxu0 0
    %1839 = vmatpush.bf16.msra.mxu0 0
    %1840 = vmatpush.bf16.msra.mxu0 0
    %1841 = vmatpush.bf16.msra.mxu0 0
    %1842 = vmatpush.bf16.msra.mxu0 0
    %1843 = vmatpush.bf16.msra.mxu0 0
    %1844 = vmatpush.bf16.msra.mxu0 %v1331
    %1845 = vmatpush.bf16.msra.mxu0 %v1330
    %1846 = vmatmul.bf16.gmra.mxu0 %v1836
    %v1847 = vpop.f32.mrf.mxu0
    %v1848 = vadd.f32 0.0, %v1847
    %v1849 = vpop.f32.mrf.mxu0
    %1850 = vdwg.mxu0
    %v1851 = vadd.f32 %v1828, %v1848
    %v1852 = vxor.u32 %v1851, 2147483648
    %v1853 = vmul.f32 %v1852, 1.442695
    %v1854 = vpow.pop %v1853
    %v1855 = vadd.f32 %v1854, 1.0
    %v1856 = vrcp.pop %v1855
    %v1857 = vmul.f32 %v1855, %v1856
    %v1858 = vsub.f32 1.0, %v1857
    %v1859 = vmul.f32 %v1856, %v1858
    %v1860 = vadd.f32 %v1856, %v1859
    %vm1861 = vweird.f32 %v1855
    %vm1862 = vweird.f32 %v1856
    %vm1863 = vmor %vm1861, %vm1862
    %v1864 = vsel %vm1863, %v1856, %v1860
    %v1865 = vand.u32 2147483647, %v1855
    %vm1866 = vcmp.eq.f32.partialorder %v1865, 8.507059e+37
    %v1867 = vand.u32 %v1855, 2147483648
    %v1868 = vor.u32 1.1754944e-38, %v1867
    %v1869 = vsel %vm1866, %v1868, %v1864
    %v1870 = vmul.f32 1.0, %v1869
    %v1871 = vtanh.pop %v1851
    %v1872 = vmul.f32 %v1870, %v1804
    %1874 = vrot.lane.b32.xlu0 %v1871, 64
    %v1875 = vpop.permute.xlu0 %1874
    %v1877 = vmul.f32 %v1870, %v1875
    %1879 = vrot.lane.b32.xlu0 %v1877, 32
    %v1880 = vpop.permute.xlu0 %1879
    %v1882 = vadd.f32 %v1872, %v1880
    %v1883 = vtanh.pop %v1882
    %1885 = vrot.lane.b32.xlu0 %v1883, 64
    %v1886 = vpop.permute.xlu0 %1885
    %v1888 = vmul.f32 %v1870, %v1886
    %v1889 = vpack.c.bf16 %v1888, %v1888
    %v1890 = vld [vmem:[%s5] sm:$0xf]
    %v1891 = vld [vmem:[%s5 + $0x4] sm:$0xf]
    %v1892 = vld [vmem:[%s5 + $0x8] sm:$0xf]
    %v1893 = vld [vmem:[%s5 + $0xc] sm:$0xf]
    %v1894 = vld [vmem:[%s6] sm:$0x1]
    %v1896 = vperm.slane %v1894, 0
    %1899 = vrot.lane.b32.xlu0 %v1889, 32
    %v1900 = vpop.permute.xlu0 %1899
    %v1905 = vunpack.c.l.b16 %v1890
    %v1906 = vunpack.c.l.b16 %v1891
    %v1907 = vunpack.c.l.b16 %v1892
    %v1908 = vunpack.c.l.b16 %v1893
    %v1909 = vpack.c.b16 %v1906, %v1905
    %v1910 = vpack.c.b16 %v1908, %v1907
    %v1914 = vsel %vm171, %v1900, 0
    %1916 = vmatpush.bf16.msra.mxu0 0
    %1917 = vmatpush.bf16.msra.mxu0 0
    %1918 = vmatpush.bf16.msra.mxu0 0
    %1919 = vmatpush.bf16.msra.mxu0 0
    %1920 = vmatpush.bf16.msra.mxu0 0
    %1921 = vmatpush.bf16.msra.mxu0 0
    %1922 = vmatpush.bf16.msra.mxu0 %v1910
    %1923 = vmatpush.bf16.msra.mxu0 %v1909
    %1924 = vmatmul.bf16.gmra.mxu0 %v1914
    %v1925 = vpop.f32.mrf.mxu0
    %v1926 = vadd.f32 %v1896, %v1925
    %v1927 = vpop.f32.mrf.mxu0
    %1928 = vdwg.mxu0
    %vm1929 = vcmask 74752
    %1930 = vst.msk [vmem:[#allocation7] sm:$0x3] %vm1929, %v1926
    // Predicated region
    $region38: #{lstm_classifier_forward.1} parent=1 // pred_check
      _
    $region39: #{lstm_classifier_forward.1} parent=1 // pred_check_branch
      %1932 = sbr.rel (0) target = $region41
    $region40: #{lstm_classifier_forward.1} parent=1 // pred_region
      %1934 = vsyncadd [#allocation4], 0
      %s1936 = sshll.u32 [#allocation7], 4
      %s1937 = int_to_ptr.vmem [resolvable:$true] %s1936
      %s1938 = sshll.u32 %s7, 4
      %s1939 = int_to_ptr.hbm [resolvable:$true] %s1938
      %1941 = dma.vmem_to_hbm [thread:$0]  %s1937, 32, %s1939, [#allocation4]
    $region41: #{lstm_classifier_forward.1} parent=1 // pred_fallthru
      _
    // Predicated region
    $region42: #{lstm_classifier_forward.1} parent=1 // pred_check
      _
    $region43: #{lstm_classifier_forward.1} parent=1 // pred_check_branch
      %1943 = sbr.rel (0) target = $region45
    $region44: #{lstm_classifier_forward.1} parent=1 // pred_region
      %1945 = dma.done [#allocation4], 32
    $region45: #{lstm_classifier_forward.1} parent=1 // pred_fallthru
      _
    %1946 = vsyncpa [#allocation3], 1
    %1947 = vsyncpa [#allocation6], 1
    %1948 = vsyncpa [#allocation4], 1

</llo_original>
